<compile_context>
chip_gen: v7x
topology: tpu7x:2x2x1
jax: 0.10.0
libtpu: 0.0.40
codegen_flags: <defaults>
</compile_context>

<pallas_src>
import functools

import jax
import jax.numpy as jnp
from jax import lax
from jax.experimental import pallas as pl
from jax.experimental.pallas import tpu as pltpu


def _self_attention_kernel(x_ref,      # (1, C, HWp) f32  full image, channel-major
                           m_ref,      # (C, C)      f32  Wq^T Wk
                           kb_ref,     # (1, C)      f32  bq^T Wk
                           wvo_ref,    # (C, C)      f32  gamma * Wo Wv
                           bo_ref,     # (C, 1)      f32  gamma * (Wo bv + bo)
                           out_ref,    # (1, C, TQ)  f32
                           *, tq, hw_valid):
    x_f32 = x_ref[0]                                    # (C, HWp) f32, resident block
    hwp = x_f32.shape[-1]
    x_bf = x_f32.astype(jnp.bfloat16)                   # keys / PV operand

    # Query tile & residual tile: sliced from the already-resident block (no extra DMA).
    off = pl.multiple_of(pl.program_id(1) * tq, 128)
    x_tile = x_ref[0, :, pl.ds(off, tq)]                # (C, TQ) f32

    # q_eff = x_tile^T (Wq^T Wk) + bq^T Wk  -- tiny, kept in f32 for accuracy.
    q_eff = lax.dot_general(x_tile, m_ref[...],
                            (((0,), (0,)), ((), ())),
                            preferred_element_type=jnp.float32)      # (TQ, C)
    q_eff = q_eff + kb_ref[...]

    # Attention logits for this query tile: (TQ, C) x (C, HWp).
    logits = jnp.dot(q_eff.astype(jnp.bfloat16), x_bf,
                     preferred_element_type=jnp.float32)             # (TQ, HWp)
    if hw_valid < hwp:  # static; only traced when HW was padded to a 128 multiple
        col = lax.broadcasted_iota(jnp.int32, logits.shape, 1)
        logits = jnp.where(col < hw_valid, logits, -1e30)

    # Numerically-stable softmax, normalisation deferred past the PV matmul.
    m_row = jnp.max(logits, axis=-1, keepdims=True)                  # (TQ, 1)
    e = jnp.exp(logits - m_row).astype(jnp.bfloat16)                 # (TQ, HWp)

    # x e^T  and the softmax denominators, both with TQ on the lane axis.
    xe = lax.dot_general(x_bf, e, (((1,), (1,)), ((), ())),
                         preferred_element_type=jnp.float32)         # (C, TQ)
    s_row = lax.dot_general(jnp.ones((1, hwp), jnp.bfloat16), e,
                            (((1,), (1,)), ((), ())),
                            preferred_element_type=jnp.float32)      # (1, TQ)

    # (gamma Wo Wv) (x e^T): tiny (C,C)x(C,TQ), kept in f32.
    attn = jnp.dot(wvo_ref[...], xe,
                   preferred_element_type=jnp.float32)               # (C, TQ)

    out_ref[0] = (attn * pl.reciprocal(s_row, approx=True)
                  + bo_ref[...] + x_tile)


def self_attention_pallas(x_nchw, params, tq=256):
    """params = (wq, bq, wk, bk, wv, bv, wo, bo, gamma); conv weights are (Cout, Cin)."""
    wq, bq, wk, bk, wv, bv, wo, bo, gamma = params
    B, C, H, W = x_nchw.shape
    HW = H * W
    f32 = jnp.float32
    hi = lax.Precision.HIGHEST

    # Pad the spatial axis to a multiple of 128 (lane-dense tiles/stores); padded key
    # columns are masked out of the softmax inside the kernel.
    HWp = ((HW + 127) // 128) * 128
    TQ = min(tq, HWp)
    if HWp % TQ != 0:
        TQ = 128                      # HWp is always a multiple of 128
    n_q = HWp // TQ

    x_cm = x_nchw.reshape(B, C, HW).astype(f32)         # channel-major (= NCHW, free)
    if HWp != HW:
        x_cm = jnp.pad(x_cm, ((0, 0), (0, 0), (0, HWp - HW)))

    g = gamma.reshape(()).astype(f32)
    m_fused = jnp.matmul(wq.T, wk, precision=hi).astype(f32)                 # (C, C)
    kb_row = jnp.matmul(bq, wk, precision=hi).reshape(1, C).astype(f32)      # (1, C)
    wvo = (g * jnp.matmul(wo, wv, precision=hi)).astype(f32)                 # (C, C)
    bo_eff = (g * (jnp.matmul(wo, bv, precision=hi) + bo)).reshape(C, 1).astype(f32)

    wmap = lambda b, q: (0, 0)
    kernel = functools.partial(_self_attention_kernel, tq=TQ, hw_valid=HW)

    out = pl.pallas_call(
        kernel,
        out_shape=jax.ShapeDtypeStruct((B, C, HWp), f32),
        grid_spec=pltpu.PrefetchScalarGridSpec(
            num_scalar_prefetch=0,
            grid=(B, n_q),
            in_specs=[
                pl.BlockSpec((1, C, HWp), lambda b, q: (b, 0, 0)),  # x: keys+queries+residual
                pl.BlockSpec((C, C), wmap),                         # Wq^T Wk
                pl.BlockSpec((1, C), wmap),                         # bq^T Wk
                pl.BlockSpec((C, C), wmap),                         # gamma * Wo Wv
                pl.BlockSpec((C, 1), wmap),                         # gamma * (Wo bv + bo)
            ],
            out_specs=pl.BlockSpec((1, C, TQ), lambda b, q: (b, 0, q)),
        ),
        compiler_params=pltpu.CompilerParams(
            dimension_semantics=("parallel", "parallel"),
            vmem_limit_bytes=32 * 1024 * 1024),
    )(x_cm, m_fused, kb_row, wvo, bo_eff)

    if HWp != HW:
        out = out[:, :, :HW]
    return out.reshape(B, C, H, W)


def _reference(x, params):
    """Plain-JAX mirror of the PyTorch forward (NCHW), for validation."""
    wq, bq, wk, bk, wv, bv, wo, bo, gamma = params
    B, C, H, W = x.shape
    HW = H * W
    hi = lax.Precision.HIGHEST

    def conv1x1(t, w, b):
        return jnp.einsum('bchw,oc->bohw', t, w, precision=hi) + b[None, :, None, None]

    q = conv1x1(x, wq, bq).reshape(B, -1, HW).transpose(0, 2, 1)   # (B, HW, Cr)
    k = conv1x1(x, wk, bk).reshape(B, -1, HW)                      # (B, Cr, HW)
    v = conv1x1(x, wv, bv).reshape(B, -1, HW)                      # (B, C, HW)
    attn = jax.nn.softmax(jnp.einsum('bic,bcj->bij', q, k, precision=hi), axis=-1)
    out = jnp.einsum('bcj,bij->bci', v, attn, precision=hi).reshape(B, C, H, W)
    out = conv1x1(out, wo, bo)
    return gamma[0] * out + x


def _make_params(key, C, reduction_ratio=16):
    """Shapes match the module. Conv weights: kaiming_normal(fan_out, relu) -> std = sqrt(2/Cout).
    The module inits biases to 0 and gamma to 0; small non-zero biases and gamma=0.5 are
    used here so the bias-fusion algebra and the attention path are actually exercised
    (forward semantics are unchanged)."""
    Cr = C // reduction_ratio
    k1, k2, k3, k4, k5 = jax.random.split(key, 5)
    wq = jax.random.normal(k1, (Cr, C), jnp.float32) * jnp.sqrt(2.0 / Cr)
    wk = jax.random.normal(k2, (Cr, C), jnp.float32) * jnp.sqrt(2.0 / Cr)
    wv = jax.random.normal(k3, (C, C), jnp.float32) * jnp.sqrt(2.0 / C)
    wo = jax.random.normal(k4, (C, C), jnp.float32) * jnp.sqrt(2.0 / C)
    b = 0.1 * jax.random.normal(k5, (2 * Cr + 2 * C,), jnp.float32)
    bq, bk = b[:Cr], b[Cr:2 * Cr]
    bv, bo = b[2 * Cr:2 * Cr + C], b[2 * Cr + C:]
    gamma = jnp.array([0.5], jnp.float32)
    return (wq, bq, wk, bk, wv, bv, wo, bo, gamma)


if __name__ == "__main__":
    key = jax.random.PRNGKey(0)
    B, C, H, W = 2, 32, 16, 16        # reduction_ratio=16 -> reduced_channels = 2
    kx, kp = jax.random.split(key)
    # Modest input scale keeps the softmax well-conditioned so the bf16 MXU path
    # stays well inside the test tolerance.
    x = 0.2 * jax.random.normal(kx, (B, C, H, W), jnp.float32)
    params = _make_params(kp, C, reduction_ratio=16)

    out = jax.block_until_ready(self_attention_pallas(x, params))

    ref = _reference(x, params)
    assert out.shape == ref.shape == (B, C, H, W)
    max_err = float(jnp.max(jnp.abs(out - ref)))
    assert jnp.allclose(out, ref, atol=3e-2, rtol=3e-2), f"max abs diff = {max_err}"
    print("KERNEL_OK")
</pallas_src>

<mosaic_0001>
module attributes {stable_mosaic.version = 11 : i64} {
  func.func @_self_attention_kernel(%arg0: i32, %arg1: i32, %arg2: memref<1x32x256xf32, #tpu.memory_space<vmem>>, %arg3: memref<32x32xf32, #tpu.memory_space<vmem>>, %arg4: memref<1x32xf32, #tpu.memory_space<vmem>>, %arg5: memref<32x32xf32, #tpu.memory_space<vmem>>, %arg6: memref<32x1xf32, #tpu.memory_space<vmem>>, %arg7: memref<1x32x256xf32, #tpu.memory_space<vmem>>) attributes {dimension_semantics = [#tpu.dimension_semantics<parallel>, #tpu.dimension_semantics<parallel>], iteration_bounds = array<i64: 2, 1>, scalar_prefetch = 0 : i64, scratch_operands = 0 : i64, tpu.core_type = #tpu.core_type<tc>, window_params = [{transform_indices = @transform_0, window_bounds = array<i64: 1, 32, 256>}, {pipeline_mode = #tpu.pipeline_mode<synchronous>, transform_indices = @transform_1, window_bounds = array<i64: 32, 32>}, {pipeline_mode = #tpu.pipeline_mode<synchronous>, transform_indices = @transform_2, window_bounds = array<i64: 1, 32>}, {pipeline_mode = #tpu.pipeline_mode<synchronous>, transform_indices = @transform_3, window_bounds = array<i64: 32, 32>}, {pipeline_mode = #tpu.pipeline_mode<synchronous>, transform_indices = @transform_4, window_bounds = array<i64: 32, 1>}, {transform_indices = @transform_5, window_bounds = array<i64: 1, 32, 256>}]} {
    %c0 = arith.constant 0 : index
    %c0_0 = arith.constant 0 : index
    %c0_1 = arith.constant 0 : index
    %0 = vector.load %arg2[%c0, %c0_0, %c0_1] : memref<1x32x256xf32, #tpu.memory_space<vmem>>, vector<1x32x256xf32>
    %1 = vector.shape_cast %0 : vector<1x32x256xf32> to vector<32x256xf32>
    %2 = arith.truncf %1 : vector<32x256xf32> to vector<32x256xbf16>
    %c256_i32 = arith.constant 256 : i32
    %3 = arith.muli %arg1, %c256_i32 : i32
    %4 = tpu.assume_multiple %3, 128 : i32
    %c0_2 = arith.constant 0 : index
    %c0_3 = arith.constant 0 : index
    %5 = arith.index_cast %4 : i32 to index
    %6 = vector.load %arg2[%c0_2, %c0_3, %5] : memref<1x32x256xf32, #tpu.memory_space<vmem>>, vector<1x32x256xf32>
    %7 = vector.shape_cast %6 : vector<1x32x256xf32> to vector<32x256xf32>
    %c0_4 = arith.constant 0 : index
    %c0_5 = arith.constant 0 : index
    %8 = vector.load %arg3[%c0_4, %c0_5] : memref<32x32xf32, #tpu.memory_space<vmem>>, vector<32x32xf32>
    %cst = arith.constant dense<0.000000e+00> : vector<256x32xf32>
    %9 = tpu.matmul %7, %8, %cst {dimension_numbers = #tpu.dot_dimension_numbers<[0], [0], [1], [1], [0, 1, 1, 1], [], []>} : vector<32x256xf32>, vector<32x32xf32>, vector<256x32xf32> -> vector<256x32xf32>
    %c0_6 = arith.constant 0 : index
    %c0_7 = arith.constant 0 : index
    %10 = vector.load %arg4[%c0_6, %c0_7] : memref<1x32xf32, #tpu.memory_space<vmem>>, vector<1x32xf32>
    %11 = vector.broadcast %10 : vector<1x32xf32> to vector<256x32xf32>
    %12 = arith.addf %9, %11 : vector<256x32xf32>
    %13 = arith.truncf %12 : vector<256x32xf32> to vector<256x32xbf16>
    %cst_8 = arith.constant dense<0.000000e+00> : vector<256x256xf32>
    %14 = tpu.matmul %13, %2, %cst_8 {dimension_numbers = #tpu.dot_dimension_numbers<[1], [0], [0], [1], [0, 0, 1, 1], [], []>} : vector<256x32xbf16>, vector<32x256xbf16>, vector<256x256xf32> -> vector<256x256xf32>
    %cst_9 = arith.constant dense<0xFF800000> : vector<256xf32>
    %15 = vector.multi_reduction <maximumf>, %14, %cst_9 [1] : vector<256x256xf32> to vector<256xf32>
    %16 = vector.shape_cast %15 : vector<256xf32> to vector<256x1xf32>
    %17 = vector.broadcast %16 : vector<256x1xf32> to vector<256x256xf32>
    %18 = arith.subf %14, %17 : vector<256x256xf32>
    %19 = math.exp %18 : vector<256x256xf32>
    %20 = arith.truncf %19 : vector<256x256xf32> to vector<256x256xbf16>
    %cst_10 = arith.constant dense<0.000000e+00> : vector<32x256xf32>
    %21 = tpu.matmul %2, %20, %cst_10 {dimension_numbers = #tpu.dot_dimension_numbers<[1], [1], [0], [0], [0, 0, 1, 0], [], []>} : vector<32x256xbf16>, vector<256x256xbf16>, vector<32x256xf32> -> vector<32x256xf32>
    %cst_11 = arith.constant 1.000000e+00 : bf16
    %22 = vector.broadcast %cst_11 : bf16 to vector<1x256xbf16>
    %cst_12 = arith.constant dense<0.000000e+00> : vector<1x256xf32>
    %23 = tpu.matmul %22, %20, %cst_12 {dimension_numbers = #tpu.dot_dimension_numbers<[1], [1], [0], [0], [0, 0, 1, 0], [], []>} : vector<1x256xbf16>, vector<256x256xbf16>, vector<1x256xf32> -> vector<1x256xf32>
    %c0_13 = arith.constant 0 : index
    %c0_14 = arith.constant 0 : index
    %24 = vector.load %arg5[%c0_13, %c0_14] : memref<32x32xf32, #tpu.memory_space<vmem>>, vector<32x32xf32>
    %cst_15 = arith.constant dense<0.000000e+00> : vector<32x256xf32>
    %25 = tpu.matmul %24, %21, %cst_15 {dimension_numbers = #tpu.dot_dimension_numbers<[1], [0], [0], [1], [0, 0, 1, 1], [], []>} : vector<32x32xf32>, vector<32x256xf32>, vector<32x256xf32> -> vector<32x256xf32>
    %26 = tpu.reciprocal %23 {approx = true} : vector<1x256xf32> -> vector<1x256xf32>
    %27 = vector.broadcast %26 : vector<1x256xf32> to vector<32x256xf32>
    %28 = arith.mulf %25, %27 : vector<32x256xf32>
    %c0_16 = arith.constant 0 : index
    %c0_17 = arith.constant 0 : index
    %29 = vector.load %arg6[%c0_16, %c0_17] : memref<32x1xf32, #tpu.memory_space<vmem>>, vector<32x1xf32>
    %30 = vector.broadcast %29 : vector<32x1xf32> to vector<32x256xf32>
    %31 = arith.addf %28, %30 : vector<32x256xf32>
    %32 = arith.addf %31, %7 : vector<32x256xf32>
    %c0_18 = arith.constant 0 : index
    %c0_19 = arith.constant 0 : index
    %c0_20 = arith.constant 0 : index
    %33 = vector.load %arg7[%c0_18, %c0_19, %c0_20] : memref<1x32x256xf32, #tpu.memory_space<vmem>>, vector<1x32x256xf32>
    %34 = vector.shape_cast %33 : vector<1x32x256xf32> to vector<32x256xf32>
    %35 = vector.shape_cast %32 : vector<32x256xf32> to vector<1x32x256xf32>
    tpu.vector_store %arg7[%c0_18, %c0_19, %c0_20], %35 {strides = array<i32>} : memref<1x32x256xf32, #tpu.memory_space<vmem>>, vector<1x32x256xf32>,
    return
  }
  func.func @transform_0(%arg0: i32, %arg1: i32) -> (i32, i32, i32) {
    %c0_i32 = arith.constant 0 : i32
    %c0_i32_0 = arith.constant 0 : i32
    %c0_i32_1 = arith.constant 0 : i32
    return %arg0, %c0_i32, %c0_i32_0 : i32, i32, i32
  }
  func.func @transform_1(%arg0: i32, %arg1: i32) -> (i32, i32) {
    %c0_i32 = arith.constant 0 : i32
    %c0_i32_0 = arith.constant 0 : i32
    %c0_i32_1 = arith.constant 0 : i32
    return %c0_i32, %c0_i32_0 : i32, i32
  }
  func.func @transform_2(%arg0: i32, %arg1: i32) -> (i32, i32) {
    %c0_i32 = arith.constant 0 : i32
    %c0_i32_0 = arith.constant 0 : i32
    %c0_i32_1 = arith.constant 0 : i32
    return %c0_i32, %c0_i32_0 : i32, i32
  }
  func.func @transform_3(%arg0: i32, %arg1: i32) -> (i32, i32) {
    %c0_i32 = arith.constant 0 : i32
    %c0_i32_0 = arith.constant 0 : i32
    %c0_i32_1 = arith.constant 0 : i32
    return %c0_i32, %c0_i32_0 : i32, i32
  }
  func.func @transform_4(%arg0: i32, %arg1: i32) -> (i32, i32) {
    %c0_i32 = arith.constant 0 : i32
    %c0_i32_0 = arith.constant 0 : i32
    %c0_i32_1 = arith.constant 0 : i32
    return %c0_i32, %c0_i32_0 : i32, i32
  }
  func.func @transform_5(%arg0: i32, %arg1: i32) -> (i32, i32, i32) {
    %c0_i32 = arith.constant 0 : i32
    %c0_i32_0 = arith.constant 0 : i32
    return %arg0, %c0_i32, %arg1 : i32, i32, i32
  }
}

</mosaic_0001>

<llo_original>
// kernel: tpu_custom_call.1
$region0: #{tpu_custom_call.1}
  #allocation0 [shape = 'u32[]', space=smem, size = 0x4, offset = 0x4, fixed_abs, tag = 'smem constant byte address 0x4 - core index']
  #allocation1 [shape = 'u32[144,128]{1,0:T(1,128)}', space=vmem, size = 0x12000, scoped, tag = 'internal scratch']
  %s0 = inlined_call_operand.hbm [shape: f32[2,32,256], index: 0, kind: input, shape index: {}]
  %s1 = inlined_call_operand.vmem [shape: f32[32,32], index: 1, kind: input, shape index: {}]
  %s2 = inlined_call_operand.vmem [shape: f32[1,32], index: 2, kind: input, shape index: {}]
  %s3 = inlined_call_operand.hbm [shape: f32[32,32], index: 3, kind: input, shape index: {}]
  %s4 = inlined_call_operand.vmem [shape: f32[32,1], index: 4, kind: input, shape index: {}]
  %s5 = inlined_call_operand.hbm [shape: f32[2,32,256], index: 5, kind: output, shape index: {}]
  %s6 = sld [smem:[#allocation0]]
  $region61: #{tpu_custom_call.1} parent=0
    _
  %s8 = ssub.s32 1, %s6
  %s9 = scalar_select 0, %s8, %s6
  $region1: #{tpu_custom_call.1} parent=0
    #allocation2 [shape = 'u8[65536]{0}', space=vmem, size = 0x10000, scoped, tag = 'input window, operand 0']
    #allocation3 [shape = 's32[2]{0}', space=sflag, size = 0x8, scoped, tag = 'scoped memory for tpu_custom_call.1']
    #allocation4 [shape = 's32[2]{0}', space=sflag, size = 0x8, scoped, tag = 'scoped memory for tpu_custom_call.1']
    #allocation5 [shape = 'u8[16384]{0}', space=vmem, size = 0x4000, scoped, tag = 'input window, operand 3, single buffered']
    #allocation6 [shape = 's32[1]{0}', space=sflag, size = 0x4, scoped, tag = 'scoped memory for tpu_custom_call.1']
    #allocation7 [shape = 'u8[65536]{0}', space=vmem, size = 0x10000, scoped, tag = 'output window, operand 0']
    %10 = vsyncpa [#allocation3], 0
    %s11 = scalar_lea.sflag [#allocation3], 1
    %12 = vsyncpa %s11, 0
    %13 = vsyncpa [#allocation6], 0
    %14 = vsyncpa [#allocation4], 0
    %s15 = scalar_lea.sflag [#allocation4], 1
    %16 = vsyncpa %s15, 0
    loop: start=0, step=1, limit=4
    $region2: #{tpu_custom_call.1} parent=1 // loop_pre_header
      _
    $region3: #{tpu_custom_call.1} parent=1 // loop_header
      %s18 = sphi 0, %s22
      %p19 = scmp.ge.s32.totalorder %s18, 4
      %s25 = sphi 0, %s37
      %s26 = sphi 0, %s33
      %s27 = sphi 0, %s25
      %s28 = sphi 0, %s26
      %s29 = sphi 0, %s27
      %s30 = sphi 0, %s28
      %s40 = sphi 0, %s42
      %s43 = sphi 0, %s40
      %s44 = sphi 0, %s43
      %s60 = sphi 0, %s44
      %s64 = sphi 0, %s64
      %s66 = sphi 0, %s64
      %s67 = sphi 0, %s66
      %s81 = sphi 0, %s67
      %s85 = sphi 0, %s85
      %s87 = sphi 0, %s85
      %s88 = sphi 0, %s87
      %s102 = sphi 0, %s88
      %s106 = sphi 0, %s106
      %s108 = sphi 0, %s106
      %s109 = sphi 0, %s108
      %s123 = sphi 0, %s109
      %s127 = sphi 0, %s127
      %s129 = sphi 0, %s127
      %s130 = sphi 0, %s129
      %s144 = sphi 0, %s130
      %s152 = sphi 0, %s154
      %s155 = sphi 0, %s152
      %s156 = sphi 0, %s155
      %s172 = sphi 0, %s156
    $region4: #{tpu_custom_call.1} parent=1 // loop_header_branch
      %21 = sbr.rel (%p19) target = $region8
    $region5: #{tpu_custom_call.1} parent=1 // loop_body
      %s23 = ssub.s32 %s18, 1
      %s24 = ssub.s32 %s18, 2
      %s31 = sadd.s32 1, %s26
      %p32 = scmp.ge.s32.totalorder %s31, 1
      %s33 = scalar_select %p32, 0, %s31
      %s34 = sadd.s32 1, %s25
      %s35 = scalar_select %p32, %s34, %s25
      %p36 = scmp.ge.s32.totalorder %s35, 2
      %s37 = scalar_select %p36, 0, %s35
      %s38 = ssub.s32 %s25, %s37
      %p39 = scmp.eq.s32.totalorder %s38, 0
      %s41 = sadd.s32 %s40, 1
      %s42 = scalar_select %p39, %s40, %s41
      %p45 = pneg %p39
      %p46 = scmp.eq.s32.totalorder %s18, 1
      %p47 = por %p45, %p46
      %p48 = scmp.ne.s32.totalorder %s40, %s43
      %p49 = scmp.eq.s32.totalorder %s18, 0
      %p50 = por %p48, %p49
      %p51 = scmp.ne.s32.totalorder %s40, %s43
      %p52 = scmp.eq.s32.totalorder %s23, 1
      %p53 = por %p51, %p52
      %p54 = scmp.ne.s32.totalorder %s43, %s44
      %p55 = scmp.eq.s32.totalorder %s23, 0
      %p56 = por %p54, %p55
      %p57 = scmp.ne.s32.totalorder %s43, %s44
      %p58 = scmp.eq.s32.totalorder %s24, 1
      %p59 = por %p57, %p58
      %p61 = scmp.ne.s32.totalorder %s44, %s60
      %p62 = scmp.eq.s32.totalorder %s24, 0
      %p63 = por %p61, %p62
      %s65 = sadd.s32 %s64, 1
      %p68 = scmp.eq.s32.totalorder %s18, 1
      %p69 = scmp.ne.s32.totalorder %s64, %s66
      %p70 = scmp.eq.s32.totalorder %s18, 0
      %p71 = por %p69, %p70
      %p72 = scmp.ne.s32.totalorder %s64, %s66
      %p73 = scmp.eq.s32.totalorder %s23, 1
      %p74 = por %p72, %p73
      %p75 = scmp.ne.s32.totalorder %s66, %s67
      %p76 = scmp.eq.s32.totalorder %s23, 0
      %p77 = por %p75, %p76
      %p78 = scmp.ne.s32.totalorder %s66, %s67
      %p79 = scmp.eq.s32.totalorder %s24, 1
      %p80 = por %p78, %p79
      %p82 = scmp.ne.s32.totalorder %s67, %s81
      %p83 = scmp.eq.s32.totalorder %s24, 0
      %p84 = por %p82, %p83
      %s86 = sadd.s32 %s85, 1
      %p89 = scmp.eq.s32.totalorder %s18, 1
      %p90 = scmp.ne.s32.totalorder %s85, %s87
      %p91 = scmp.eq.s32.totalorder %s18, 0
      %p92 = por %p90, %p91
      %p93 = scmp.ne.s32.totalorder %s85, %s87
      %p94 = scmp.eq.s32.totalorder %s23, 1
      %p95 = por %p93, %p94
      %p96 = scmp.ne.s32.totalorder %s87, %s88
      %p97 = scmp.eq.s32.totalorder %s23, 0
      %p98 = por %p96, %p97
      %p99 = scmp.ne.s32.totalorder %s87, %s88
      %p100 = scmp.eq.s32.totalorder %s24, 1
      %p101 = por %p99, %p100
      %p103 = scmp.ne.s32.totalorder %s88, %s102
      %p104 = scmp.eq.s32.totalorder %s24, 0
      %p105 = por %p103, %p104
      %s107 = sadd.s32 %s106, 1
      %p110 = scmp.eq.s32.totalorder %s18, 1
      %p111 = scmp.ne.s32.totalorder %s106, %s108
      %p112 = scmp.eq.s32.totalorder %s18, 0
      %p113 = por %p111, %p112
      %p114 = scmp.ne.s32.totalorder %s106, %s108
      %p115 = scmp.eq.s32.totalorder %s23, 1
      %p116 = por %p114, %p115
      %p117 = scmp.ne.s32.totalorder %s108, %s109
      %p118 = scmp.eq.s32.totalorder %s23, 0
      %p119 = por %p117, %p118
      %p120 = scmp.ne.s32.totalorder %s108, %s109
      %p121 = scmp.eq.s32.totalorder %s24, 1
      %p122 = por %p120, %p121
      %p124 = scmp.ne.s32.totalorder %s109, %s123
      %p125 = scmp.eq.s32.totalorder %s24, 0
      %p126 = por %p124, %p125
      %s128 = sadd.s32 %s127, 1
      %p131 = scmp.eq.s32.totalorder %s18, 1
      %p132 = scmp.ne.s32.totalorder %s127, %s129
      %p133 = scmp.eq.s32.totalorder %s18, 0
      %p134 = por %p132, %p133
      %p135 = scmp.ne.s32.totalorder %s127, %s129
      %p136 = scmp.eq.s32.totalorder %s23, 1
      %p137 = por %p135, %p136
      %p138 = scmp.ne.s32.totalorder %s129, %s130
      %p139 = scmp.eq.s32.totalorder %s23, 0
      %p140 = por %p138, %p139
      %p141 = scmp.ne.s32.totalorder %s129, %s130
      %p142 = scmp.eq.s32.totalorder %s24, 1
      %p143 = por %p141, %p142
      %p145 = scmp.ne.s32.totalorder %s130, %s144
      %p146 = scmp.eq.s32.totalorder %s24, 0
      %p147 = por %p145, %p146
      %s148 = ssub.s32 %s25, %s37
      %s149 = ssub.s32 %s26, %s33
      %s150 = sor.u32 %s148, %s149
      %p151 = scmp.eq.s32.totalorder %s150, 0
      %s153 = sadd.s32 %s152, 1
      %s154 = scalar_select %p151, %s152, %s153
      %p157 = pneg %p151
      %p158 = scmp.eq.s32.totalorder %s18, 1
      %p159 = por %p157, %p158
      %p160 = scmp.ne.s32.totalorder %s152, %s155
      %p161 = scmp.eq.s32.totalorder %s18, 0
      %p162 = por %p160, %p161
      %p163 = scmp.ne.s32.totalorder %s152, %s155
      %p164 = scmp.eq.s32.totalorder %s23, 1
      %p165 = por %p163, %p164
      %p166 = scmp.ne.s32.totalorder %s155, %s156
      %p167 = scmp.eq.s32.totalorder %s23, 0
      %p168 = por %p166, %p167
      %p169 = scmp.ne.s32.totalorder %s155, %s156
      %p170 = scmp.eq.s32.totalorder %s24, 1
      %p171 = por %p169, %p170
      %p173 = scmp.ne.s32.totalorder %s156, %s172
      %p174 = scmp.eq.s32.totalorder %s24, 0
      %p175 = por %p173, %p174
      %p176 = scmp.le.s32.totalorder 1, %s18
      %p177 = scmp.lt.s32.totalorder %s18, 3
      %p178 = pnand %p176, %p177
      %p179 = pneg %p178
      // Predicated region
      $region9: #{tpu_custom_call.1} parent=5 // pred_check
        _
      $region10: #{tpu_custom_call.1} parent=5 // pred_check_branch
        %181 = sbr.rel (%p178) target = $region12
      $region11: #{tpu_custom_call.1} parent=5 // pred_region
        %s182 = ssub.s32 %s18, 1
        // Predicated region
        $region13: #{tpu_custom_call.1} parent=11 // pred_check
          %p183 = pneg %p77
        $region14: #{tpu_custom_call.1} parent=11 // pred_check_branch
          %185 = sbr.rel (%p183) target = $region16
        $region15: #{tpu_custom_call.1} parent=11 // pred_region
          _
        $region16: #{tpu_custom_call.1} parent=11 // pred_fallthru
          _
        // Predicated region
        $region17: #{tpu_custom_call.1} parent=11 // pred_check
          %p186 = pneg %p98
        $region18: #{tpu_custom_call.1} parent=11 // pred_check_branch
          %188 = sbr.rel (%p186) target = $region20
        $region19: #{tpu_custom_call.1} parent=11 // pred_region
          _
        $region20: #{tpu_custom_call.1} parent=11 // pred_fallthru
          _
        // Predicated region
        $region21: #{tpu_custom_call.1} parent=11 // pred_check
          %p189 = pneg %p119
        $region22: #{tpu_custom_call.1} parent=11 // pred_check_branch
          %191 = sbr.rel (%p189) target = $region24
        $region23: #{tpu_custom_call.1} parent=11 // pred_region
          %s193 = ssub.s32 512, 512
          %194 = vsyncadd [#allocation6], %s193
          %s195 = sshll.u32 [#allocation5], 4
          %s196 = int_to_ptr.vmem [resolvable:$true] %s195
          %201 = dma.hbm_to_vmem [thread:$0]  %s3, 512, %s196, [#allocation6], 128, 128, 8
        $region24: #{tpu_custom_call.1} parent=11 // pred_fallthru
          _
        // Predicated region
        $region25: #{tpu_custom_call.1} parent=11 // pred_check
          %p202 = pneg %p140
        $region26: #{tpu_custom_call.1} parent=11 // pred_check_branch
          %204 = sbr.rel (%p202) target = $region28
        $region27: #{tpu_custom_call.1} parent=11 // pred_region
          _
        $region28: #{tpu_custom_call.1} parent=11 // pred_fallthru
          _
      $region12: #{tpu_custom_call.1} parent=5 // pred_fallthru
        _
      %p205 = scmp.lt.s32.totalorder %s18, 2
      // Predicated region
      $region29: #{tpu_custom_call.1} parent=5 // pred_check
        %p206 = pneg %p205
      $region30: #{tpu_custom_call.1} parent=5 // pred_check_branch
        %208 = sbr.rel (%p206) target = $region32
      $region31: #{tpu_custom_call.1} parent=5 // pred_region
        // Predicated region
        $region33: #{tpu_custom_call.1} parent=31 // pred_check
          %p209 = pneg %p50
        $region34: #{tpu_custom_call.1} parent=31 // pred_check_branch
          %211 = sbr.rel (%p209) target = $region36
        $region35: #{tpu_custom_call.1} parent=31 // pred_region
          %s212 = sand.u32 %s40, 1
          %s213 = scalar_lea.sflag [#allocation3], %s212
          %s214 = sand.u32 %s40, 1
          %s215 = smul.addr %s214, 64
          %s216 = scalar_lea.vmem [#allocation2], %s215
          %s218 = ssub.s32 1024, 1024
          %219 = vsyncadd %s213, %s218
          %s220 = smul.addr %s25, 8
          %s221 = smul.addr %s220, 128
          %s222 = scalar_lea.hbm %s0, %s221
          %s223 = sshll.u32 %s216, 4
          %s224 = int_to_ptr.vmem [resolvable:$true] %s223
          %229 = dma.hbm_to_vmem [thread:$0]  %s222, 1024, %s224, %s213, 256, 256, 16
        $region36: #{tpu_custom_call.1} parent=31 // pred_fallthru
          _
      $region32: #{tpu_custom_call.1} parent=5 // pred_fallthru
        _
      %p230 = scmp.le.s32.totalorder 1, %s18
      %p231 = scmp.lt.s32.totalorder %s18, 3
      %p232 = pnand %p230, %p231
      %p233 = pneg %p232
      // Predicated region
      $region37: #{tpu_custom_call.1} parent=5 // pred_check
        _
      $region38: #{tpu_custom_call.1} parent=5 // pred_check_branch
        %235 = sbr.rel (%p232) target = $region40
      $region39: #{tpu_custom_call.1} parent=5 // pred_region
        %s236 = ssub.s32 %s18, 1
        %s237 = sand.u32 %s43, 1
        %s238 = scalar_lea.sflag [#allocation3], %s237
        %s239 = sand.u32 %s43, 1
        %s240 = smul.addr %s239, 64
        %s241 = scalar_lea.vmem [#allocation2], %s240
        // Predicated region
        $region41: #{tpu_custom_call.1} parent=39 // pred_check
          %p242 = pneg %p56
        $region42: #{tpu_custom_call.1} parent=39 // pred_check_branch
          %244 = sbr.rel (%p242) target = $region44
        $region43: #{tpu_custom_call.1} parent=39 // pred_region
          %245 = dma.done %s238, 1024
        $region44: #{tpu_custom_call.1} parent=39 // pred_fallthru
          _
        // Predicated region
        $region45: #{tpu_custom_call.1} parent=39 // pred_check
          %p246 = pneg %p119
        $region46: #{tpu_custom_call.1} parent=39 // pred_check_branch
          %248 = sbr.rel (%p246) target = $region48
        $region47: #{tpu_custom_call.1} parent=39 // pred_region
          %249 = dma.done [#allocation6], 512
        $region48: #{tpu_custom_call.1} parent=39 // pred_fallthru
          _
        %s250 = sand.u32 %s43, 1
        %s251 = scalar_lea.sflag [#allocation3], %s250
        %s252 = sand.u32 %s43, 1
        %s253 = smul.addr %s252, 64
        %s254 = scalar_lea.vmem [#allocation2], %s253
        %p255 = pneg %p56
        %p256 = pneg %p53
        %p257 = pneg %p77
        %p258 = pneg %p74
        %p259 = pneg %p98
        %p260 = pneg %p95
        %p261 = pneg %p119
        %p262 = pneg %p116
        %p263 = pneg %p140
        %p264 = pneg %p137
        %p265 = pneg %p168
        %p266 = pneg %p165
        %s267 = sand.u32 %s155, 1
        %s268 = scalar_lea.sflag [#allocation4], %s267
        %s269 = sand.u32 %s155, 1
        %s270 = smul.addr %s269, 64
        %s271 = scalar_lea.vmem [#allocation7], %s270
        %s272 = smul.u32 2, %s28
        %v275 = vld [vmem:[%s241] sm:$0xff]
        %v276 = vld [vmem:[%s241 + $0x8] sm:$0xff]
        %v277 = vld [vmem:[%s241 + $0x10] sm:$0xff]
        %v278 = vld [vmem:[%s241 + $0x18] sm:$0xff]
        %v279 = vld [vmem:[%s241 + $0x20] sm:$0xff]
        %v280 = vld [vmem:[%s241 + $0x28] sm:$0xff]
        %v281 = vld [vmem:[%s241 + $0x30] sm:$0xff]
        %v282 = vld [vmem:[%s241 + $0x38] sm:$0xff]
        %v283 = vpack.c.bf16 %v277, %v275
        %v284 = vpack.c.bf16 %v278, %v276
        %v285 = vpack.c.bf16 %v281, %v279
        %v286 = vpack.c.bf16 %v282, %v280
        %s287 = smul.u32 %s28, 256
        %s288 = sshra.s32 %s287, 7
        %s289 = sand.u32 %s287, 127
        %s290 = smul.addr %s288, 8
        %s291 = scalar_lea.vmem %s241, %s290 [#allocation2]
        %v292 = vld [vmem:[%s291] sm:$0xff]
        %v293 = vld [vmem:[%s291 + $0x8] sm:$0xff]
        %v294 = vld [vmem:[%s291 + $0x10] sm:$0xff]
        %v295 = vld [vmem:[%s291 + $0x18] sm:$0xff]
        %v296 = vld [vmem:[%s291 + $0x20] sm:$0xff]
        %v297 = vld [vmem:[%s291 + $0x28] sm:$0xff]
        %v298 = vld [vmem:[%s291 + $0x30] sm:$0xff]
        %v299 = vld [vmem:[%s291 + $0x38] sm:$0xff]
        %v300 = vld [vmem:[%s1] sm:$0xff]
        %v301 = vld [vmem:[%s1 + $0x8] sm:$0xff]
        %v302 = vld [vmem:[%s1 + $0x10] sm:$0xff]
        %v303 = vld [vmem:[%s1 + $0x18] sm:$0xff]
        %v304 = vld [vmem:[%s2] sm:$0x1]
        %v306 = vlaneseq
        %v307 = vshrl.u32 %v306, 7
        %v308 = vsub.s32 0, %v307
        %v309 = vrot.slane %v304, %v308
        %311 = vxpose.xlu0.b32.start [1/16] %v292, 128
        %312 = vxpose.xlu0.b32.cont [2/16] %v294, 128
        %313 = vxpose.xlu0.b32.cont [3/16] %v296, 128
        %314 = vxpose.xlu0.b32.cont [4/16] %v298, 128
        %315 = vxpose.xlu0.b32.cont [5/16] 0.0, 128
        %316 = vxpose.xlu0.b32.cont [6/16] 0.0, 128
        %317 = vxpose.xlu0.b32.cont [7/16] 0.0, 128
        %318 = vxpose.xlu0.b32.cont [8/16] 0.0, 128
        %319 = vxpose.xlu0.b32.cont [9/16] 0.0, 128
        %320 = vxpose.xlu0.b32.cont [10/16] 0.0, 128
        %321 = vxpose.xlu0.b32.cont [11/16] 0.0, 128
        %322 = vxpose.xlu0.b32.cont [12/16] 0.0, 128
        %323 = vxpose.xlu0.b32.cont [13/16] 0.0, 128
        %324 = vxpose.xlu0.b32.cont [14/16] 0.0, 128
        %325 = vxpose.xlu0.b32.cont [15/16] 0.0, 128
        %326 = vxpose.xlu0.b32.end [16/16] 0.0, 128
        %v327 = vpop.trf.xlu0
        %v328 = vpop.trf.xlu0
        %v329 = vpop.trf.xlu0
        %v330 = vpop.trf.xlu0
        %v331 = vpop.trf.xlu0
        %v332 = vpop.trf.xlu0
        %v333 = vpop.trf.xlu0
        %v334 = vpop.trf.xlu0
        %v335 = vpop.trf.xlu0
        %v336 = vpop.trf.xlu0
        %v337 = vpop.trf.xlu0
        %v338 = vpop.trf.xlu0
        %v339 = vpop.trf.xlu0
        %v340 = vpop.trf.xlu0
        %v341 = vpop.trf.xlu0
        %v342 = vpop.trf.xlu0
        %343 = vxpose.xlu0.b32.start [1/16] %v293, 128
        %344 = vxpose.xlu0.b32.cont [2/16] %v295, 128
        %345 = vxpose.xlu0.b32.cont [3/16] %v297, 128
        %346 = vxpose.xlu0.b32.cont [4/16] %v299, 128
        %347 = vxpose.xlu0.b32.cont [5/16] 0.0, 128
        %348 = vxpose.xlu0.b32.cont [6/16] 0.0, 128
        %349 = vxpose.xlu0.b32.cont [7/16] 0.0, 128
        %350 = vxpose.xlu0.b32.cont [8/16] 0.0, 128
        %351 = vxpose.xlu0.b32.cont [9/16] 0.0, 128
        %352 = vxpose.xlu0.b32.cont [10/16] 0.0, 128
        %353 = vxpose.xlu0.b32.cont [11/16] 0.0, 128
        %354 = vxpose.xlu0.b32.cont [12/16] 0.0, 128
        %355 = vxpose.xlu0.b32.cont [13/16] 0.0, 128
        %356 = vxpose.xlu0.b32.cont [14/16] 0.0, 128
        %357 = vxpose.xlu0.b32.cont [15/16] 0.0, 128
        %358 = vxpose.xlu0.b32.end [16/16] 0.0, 128
        %v359 = vpop.trf.xlu0
        %v360 = vpop.trf.xlu0
        %v361 = vpop.trf.xlu0
        %v362 = vpop.trf.xlu0
        %v363 = vpop.trf.xlu0
        %v364 = vpop.trf.xlu0
        %v365 = vpop.trf.xlu0
        %v366 = vpop.trf.xlu0
        %v367 = vpop.trf.xlu0
        %v368 = vpop.trf.xlu0
        %v369 = vpop.trf.xlu0
        %v370 = vpop.trf.xlu0
        %v371 = vpop.trf.xlu0
        %v372 = vpop.trf.xlu0
        %v373 = vpop.trf.xlu0
        %v374 = vpop.trf.xlu0
        %vm375 = vcmask 261120
        %v377 = vsel %vm375, %v327, 0
        %v380 = vsel %vm375, %v328, 0
        %v383 = vsel %vm375, %v329, 0
        %v386 = vsel %vm375, %v330, 0
        %v389 = vsel %vm375, %v331, 0
        %v392 = vsel %vm375, %v332, 0
        %v395 = vsel %vm375, %v333, 0
        %v398 = vsel %vm375, %v334, 0
        %v401 = vsel %vm375, %v335, 0
        %v404 = vsel %vm375, %v336, 0
        %v407 = vsel %vm375, %v337, 0
        %v410 = vsel %vm375, %v338, 0
        %v413 = vsel %vm375, %v339, 0
        %v416 = vsel %vm375, %v340, 0
        %v419 = vsel %vm375, %v341, 0
        %v422 = vsel %vm375, %v342, 0
        %v425 = vsel %vm375, %v359, 0
        %v428 = vsel %vm375, %v360, 0
        %v431 = vsel %vm375, %v361, 0
        %v434 = vsel %vm375, %v362, 0
        %v437 = vsel %vm375, %v363, 0
        %v440 = vsel %vm375, %v364, 0
        %v443 = vsel %vm375, %v365, 0
        %v446 = vsel %vm375, %v366, 0
        %v449 = vsel %vm375, %v367, 0
        %v452 = vsel %vm375, %v368, 0
        %v455 = vsel %vm375, %v369, 0
        %v458 = vsel %vm375, %v370, 0
        %v461 = vsel %vm375, %v371, 0
        %v464 = vsel %vm375, %v372, 0
        %v467 = vsel %vm375, %v373, 0
        %v470 = vsel %vm375, %v374, 0
        %472 = vmatprep.subr.mxu0 0.0
        %473 = vmatpush1.msra.mxu0 %v300
        %474 = vmatprep.subr.mxu0 0.0
        %475 = vmatpush1.msra.mxu0 %v301
        %476 = vmatprep.subr.mxu0 0.0
        %477 = vmatpush1.msra.mxu0 %v302
        %478 = vmatprep.subr.mxu0 0.0
        %479 = vmatpush1.msra.mxu0 %v303
        %480 = vmatprep.subr.mxu0 0.0
        %481 = vmatpush1.msra.mxu0 0.0
        %482 = vmatprep.subr.mxu0 0.0
        %483 = vmatpush1.msra.mxu0 0.0
        %484 = vmatprep.subr.mxu0 0.0
        %485 = vmatpush1.msra.mxu0 0.0
        %486 = vmatprep.subr.mxu0 0.0
        %487 = vmatpush1.msra.mxu0 0.0
        %488 = vmatprep.subr.mxu0 0.0
        %489 = vmatpush1.msra.mxu0 0.0
        %490 = vmatprep.subr.mxu0 0.0
        %491 = vmatpush1.msra.mxu0 0.0
        %492 = vmatprep.subr.mxu0 0.0
        %493 = vmatpush1.msra.mxu0 0.0
        %494 = vmatprep.subr.mxu0 0.0
        %495 = vmatpush1.msra.mxu0 0.0
        %496 = vmatprep.subr.mxu0 0.0
        %497 = vmatpush1.msra.mxu0 0.0
        %498 = vmatprep.subr.mxu0 0.0
        %499 = vmatpush1.msra.mxu0 0.0
        %500 = vmatprep.subr.mxu0 0.0
        %501 = vmatpush1.msra.mxu0 0.0
        %502 = vmatprep.subr.mxu0 0.0
        %503 = vmatpush1.msra.mxu0 0.0
        %504 = vmatprep.subr.mxu0 0.0
        %505 = vmatpush1.msra.mxu0 0.0
        %506 = vmatprep.subr.mxu0 0.0
        %507 = vmatpush1.msra.mxu0 0.0
        %508 = vmatprep.subr.mxu0 0.0
        %509 = vmatpush1.msra.mxu0 0.0
        %510 = vmatprep.subr.mxu0 0.0
        %511 = vmatpush1.msra.mxu0 0.0
        %512 = vmatprep.subr.mxu0 0.0
        %513 = vmatpush1.msra.mxu0 0.0
        %514 = vmatprep.subr.mxu0 0.0
        %515 = vmatpush1.msra.mxu0 0.0
        %516 = vmatprep.subr.mxu0 0.0
        %517 = vmatpush1.msra.mxu0 0.0
        %518 = vmatprep.subr.mxu0 0.0
        %519 = vmatpush1.msra.mxu0 0.0
        %520 = vmatprep.subr.mxu0 0.0
        %521 = vmatpush1.msra.mxu0 0.0
        %522 = vmatprep.subr.mxu0 0.0
        %523 = vmatpush1.msra.mxu0 0.0
        %524 = vmatprep.subr.mxu0 0.0
        %525 = vmatpush1.msra.mxu0 0.0
        %526 = vmatprep.subr.mxu0 0.0
        %527 = vmatpush1.msra.mxu0 0.0
        %528 = vmatprep.subr.mxu0 0.0
        %529 = vmatpush1.msra.mxu0 0.0
        %530 = vmatprep.subr.mxu0 0.0
        %531 = vmatpush1.msra.mxu0 0.0
        %532 = vmatprep.subr.mxu0 0.0
        %533 = vmatpush1.msra.mxu0 0.0
        %534 = vmatprep.subr.mxu0 0.0
        %535 = vmatpush1.msra.mxu0 0.0
        %536 = vmatprep.mubr.f32.mxu0 0.0
        %537 = vmatmul.mubr.f32.gmra.mrb[0].mxu0 %v377
        %v538 = vpop.f32.mrb[0].mxu0
        %v539 = vadd.f32 %v309, %v538
        %v540 = vpop.f32.mrb[0].mxu0
        %541 = vmatprep.mubr.f32.mxu0 0.0
        %542 = vmatmul.mubr.f32.gmra.mrb[0].mxu0 %v380
        %v543 = vpop.f32.mrb[0].mxu0
        %v544 = vadd.f32 %v309, %v543
        %v545 = vpop.f32.mrb[0].mxu0
        %546 = vmatprep.mubr.f32.mxu0 0.0
        %547 = vmatmul.mubr.f32.gmra.mrb[0].mxu0 %v383
        %v548 = vpop.f32.mrb[0].mxu0
        %v549 = vadd.f32 %v309, %v548
        %v550 = vpop.f32.mrb[0].mxu0
        %551 = vmatprep.mubr.f32.mxu0 0.0
        %552 = vmatmul.mubr.f32.gmra.mrb[0].mxu0 %v386
        %v553 = vpop.f32.mrb[0].mxu0
        %v554 = vadd.f32 %v309, %v553
        %v555 = vpop.f32.mrb[0].mxu0
        %556 = vmatprep.mubr.f32.mxu0 0.0
        %557 = vmatmul.mubr.f32.gmra.mrb[0].mxu0 %v389
        %v558 = vpop.f32.mrb[0].mxu0
        %v559 = vadd.f32 %v309, %v558
        %v560 = vpop.f32.mrb[0].mxu0
        %561 = vmatprep.mubr.f32.mxu0 0.0
        %562 = vmatmul.mubr.f32.gmra.mrb[0].mxu0 %v392
        %v563 = vpop.f32.mrb[0].mxu0
        %v564 = vadd.f32 %v309, %v563
        %v565 = vpop.f32.mrb[0].mxu0
        %566 = vmatprep.mubr.f32.mxu0 0.0
        %567 = vmatmul.mubr.f32.gmra.mrb[0].mxu0 %v395
        %v568 = vpop.f32.mrb[0].mxu0
        %v569 = vadd.f32 %v309, %v568
        %v570 = vpop.f32.mrb[0].mxu0
        %571 = vmatprep.mubr.f32.mxu0 0.0
        %572 = vmatmul.mubr.f32.gmra.mrb[0].mxu0 %v398
        %v573 = vpop.f32.mrb[0].mxu0
        %v574 = vadd.f32 %v309, %v573
        %v575 = vpop.f32.mrb[0].mxu0
        %576 = vmatprep.mubr.f32.mxu0 0.0
        %577 = vmatmul.mubr.f32.gmra.mrb[0].mxu0 %v401
        %v578 = vpop.f32.mrb[0].mxu0
        %v579 = vadd.f32 %v309, %v578
        %v580 = vpop.f32.mrb[0].mxu0
        %581 = vmatprep.mubr.f32.mxu0 0.0
        %582 = vmatmul.mubr.f32.gmra.mrb[0].mxu0 %v404
        %v583 = vpop.f32.mrb[0].mxu0
        %v584 = vadd.f32 %v309, %v583
        %v585 = vpop.f32.mrb[0].mxu0
        %586 = vmatprep.mubr.f32.mxu0 0.0
        %587 = vmatmul.mubr.f32.gmra.mrb[0].mxu0 %v407
        %v588 = vpop.f32.mrb[0].mxu0
        %v589 = vadd.f32 %v309, %v588
        %v590 = vpop.f32.mrb[0].mxu0
        %591 = vmatprep.mubr.f32.mxu0 0.0
        %592 = vmatmul.mubr.f32.gmra.mrb[0].mxu0 %v410
        %v593 = vpop.f32.mrb[0].mxu0
        %v594 = vadd.f32 %v309, %v593
        %v595 = vpop.f32.mrb[0].mxu0
        %596 = vmatprep.mubr.f32.mxu0 0.0
        %597 = vmatmul.mubr.f32.gmra.mrb[0].mxu0 %v413
        %v598 = vpop.f32.mrb[0].mxu0
        %v599 = vadd.f32 %v309, %v598
        %v600 = vpop.f32.mrb[0].mxu0
        %601 = vmatprep.mubr.f32.mxu0 0.0
        %602 = vmatmul.mubr.f32.gmra.mrb[0].mxu0 %v416
        %v603 = vpop.f32.mrb[0].mxu0
        %v604 = vadd.f32 %v309, %v603
        %v605 = vpop.f32.mrb[0].mxu0
        %606 = vmatprep.mubr.f32.mxu0 0.0
        %607 = vmatmul.mubr.f32.gmra.mrb[0].mxu0 %v419
        %v608 = vpop.f32.mrb[0].mxu0
        %v609 = vadd.f32 %v309, %v608
        %v610 = vpop.f32.mrb[0].mxu0
        %611 = vmatprep.mubr.f32.mxu0 0.0
        %612 = vmatmul.mubr.f32.gmra.mrb[0].mxu0 %v422
        %v613 = vpop.f32.mrb[0].mxu0
        %v614 = vadd.f32 %v309, %v613
        %v615 = vpop.f32.mrb[0].mxu0
        %616 = vmatprep.mubr.f32.mxu0 0.0
        %617 = vmatmul.mubr.f32.gmra.mrb[0].mxu0 %v425
        %v618 = vpop.f32.mrb[0].mxu0
        %v619 = vadd.f32 %v309, %v618
        %v620 = vpop.f32.mrb[0].mxu0
        %621 = vmatprep.mubr.f32.mxu0 0.0
        %622 = vmatmul.mubr.f32.gmra.mrb[0].mxu0 %v428
        %v623 = vpop.f32.mrb[0].mxu0
        %v624 = vadd.f32 %v309, %v623
        %v625 = vpop.f32.mrb[0].mxu0
        %626 = vmatprep.mubr.f32.mxu0 0.0
        %627 = vmatmul.mubr.f32.gmra.mrb[0].mxu0 %v431
        %v628 = vpop.f32.mrb[0].mxu0
        %v629 = vadd.f32 %v309, %v628
        %v630 = vpop.f32.mrb[0].mxu0
        %631 = vmatprep.mubr.f32.mxu0 0.0
        %632 = vmatmul.mubr.f32.gmra.mrb[0].mxu0 %v434
        %v633 = vpop.f32.mrb[0].mxu0
        %v634 = vadd.f32 %v309, %v633
        %v635 = vpop.f32.mrb[0].mxu0
        %636 = vmatprep.mubr.f32.mxu0 0.0
        %637 = vmatmul.mubr.f32.gmra.mrb[0].mxu0 %v437
        %v638 = vpop.f32.mrb[0].mxu0
        %v639 = vadd.f32 %v309, %v638
        %v640 = vpop.f32.mrb[0].mxu0
        %641 = vmatprep.mubr.f32.mxu0 0.0
        %642 = vmatmul.mubr.f32.gmra.mrb[0].mxu0 %v440
        %v643 = vpop.f32.mrb[0].mxu0
        %v644 = vadd.f32 %v309, %v643
        %v645 = vpop.f32.mrb[0].mxu0
        %646 = vmatprep.mubr.f32.mxu0 0.0
        %647 = vmatmul.mubr.f32.gmra.mrb[0].mxu0 %v443
        %v648 = vpop.f32.mrb[0].mxu0
        %v649 = vadd.f32 %v309, %v648
        %v650 = vpop.f32.mrb[0].mxu0
        %651 = vmatprep.mubr.f32.mxu0 0.0
        %652 = vmatmul.mubr.f32.gmra.mrb[0].mxu0 %v446
        %v653 = vpop.f32.mrb[0].mxu0
        %v654 = vadd.f32 %v309, %v653
        %v655 = vpop.f32.mrb[0].mxu0
        %656 = vmatprep.mubr.f32.mxu0 0.0
        %657 = vmatmul.mubr.f32.gmra.mrb[0].mxu0 %v449
        %v658 = vpop.f32.mrb[0].mxu0
        %v659 = vadd.f32 %v309, %v658
        %v660 = vpop.f32.mrb[0].mxu0
        %661 = vmatprep.mubr.f32.mxu0 0.0
        %662 = vmatmul.mubr.f32.gmra.mrb[0].mxu0 %v452
        %v663 = vpop.f32.mrb[0].mxu0
        %v664 = vadd.f32 %v309, %v663
        %v665 = vpop.f32.mrb[0].mxu0
        %666 = vmatprep.mubr.f32.mxu0 0.0
        %667 = vmatmul.mubr.f32.gmra.mrb[0].mxu0 %v455
        %v668 = vpop.f32.mrb[0].mxu0
        %v669 = vadd.f32 %v309, %v668
        %v670 = vpop.f32.mrb[0].mxu0
        %671 = vmatprep.mubr.f32.mxu0 0.0
        %672 = vmatmul.mubr.f32.gmra.mrb[0].mxu0 %v458
        %v673 = vpop.f32.mrb[0].mxu0
        %v674 = vadd.f32 %v309, %v673
        %v675 = vpop.f32.mrb[0].mxu0
        %676 = vmatprep.mubr.f32.mxu0 0.0
        %677 = vmatmul.mubr.f32.gmra.mrb[0].mxu0 %v461
        %v678 = vpop.f32.mrb[0].mxu0
        %v679 = vadd.f32 %v309, %v678
        %v680 = vpop.f32.mrb[0].mxu0
        %681 = vmatprep.mubr.f32.mxu0 0.0
        %682 = vmatmul.mubr.f32.gmra.mrb[0].mxu0 %v464
        %v683 = vpop.f32.mrb[0].mxu0
        %v684 = vadd.f32 %v309, %v683
        %v685 = vpop.f32.mrb[0].mxu0
        %686 = vmatprep.mubr.f32.mxu0 0.0
        %687 = vmatmul.mubr.f32.gmra.mrb[0].mxu0 %v467
        %v688 = vpop.f32.mrb[0].mxu0
        %v689 = vadd.f32 %v309, %v688
        %v690 = vpop.f32.mrb[0].mxu0
        %691 = vmatprep.mubr.f32.mxu0 0.0
        %692 = vmatmul.mubr.f32.gmra.mrb[0].mxu0 %v470
        %v693 = vpop.f32.mrb[0].mxu0
        %v694 = vadd.f32 %v309, %v693
        %v695 = vpop.f32.mrb[0].mxu0
        %696 = vdwg.mxu0
        %v697 = vpack.c.bf16 %v544, %v539
        %v698 = vpack.c.bf16 %v554, %v549
        %v699 = vpack.c.bf16 %v564, %v559
        %v700 = vpack.c.bf16 %v574, %v569
        %v701 = vpack.c.bf16 %v584, %v579
        %v702 = vpack.c.bf16 %v594, %v589
        %v703 = vpack.c.bf16 %v604, %v599
        %v704 = vpack.c.bf16 %v614, %v609
        %v705 = vpack.c.bf16 %v624, %v619
        %v706 = vpack.c.bf16 %v634, %v629
        %v707 = vpack.c.bf16 %v644, %v639
        %v708 = vpack.c.bf16 %v654, %v649
        %v709 = vpack.c.bf16 %v664, %v659
        %v710 = vpack.c.bf16 %v674, %v669
        %v711 = vpack.c.bf16 %v684, %v679
        %v712 = vpack.c.bf16 %v694, %v689
        %v714 = vsel %vm375, %v697, 0
        %v717 = vsel %vm375, %v698, 0
        %v720 = vsel %vm375, %v699, 0
        %v723 = vsel %vm375, %v700, 0
        %v726 = vsel %vm375, %v701, 0
        %v729 = vsel %vm375, %v702, 0
        %v732 = vsel %vm375, %v703, 0
        %v735 = vsel %vm375, %v704, 0
        %v738 = vsel %vm375, %v705, 0
        %v741 = vsel %vm375, %v706, 0
        %v744 = vsel %vm375, %v707, 0
        %v747 = vsel %vm375, %v708, 0
        %v750 = vsel %vm375, %v709, 0
        %v753 = vsel %vm375, %v710, 0
        %v756 = vsel %vm375, %v711, 0
        %v759 = vsel %vm375, %v712, 0
        %761 = vmatprep.subr.bf16.mxu0 %v284
        %762 = vmatpush1.bf16.msra.mxu0 %v283
        %763 = vmatprep.subr.bf16.mxu0 %v286
        %764 = vmatpush1.bf16.msra.mxu0 %v285
        %765 = vmatprep.subr.bf16.mxu0 0
        %766 = vmatpush1.bf16.msra.mxu0 0
        %767 = vmatprep.subr.bf16.mxu0 0
        %768 = vmatpush1.bf16.msra.mxu0 0
        %769 = vmatprep.subr.bf16.mxu0 0
        %770 = vmatpush1.bf16.msra.mxu0 0
        %771 = vmatprep.subr.bf16.mxu0 0
        %772 = vmatpush1.bf16.msra.mxu0 0
        %773 = vmatprep.subr.bf16.mxu0 0
        %774 = vmatpush1.bf16.msra.mxu0 0
        %775 = vmatprep.subr.bf16.mxu0 0
        %776 = vmatpush1.bf16.msra.mxu0 0
        %777 = vmatprep.subr.bf16.mxu0 0
        %778 = vmatpush1.bf16.msra.mxu0 0
        %779 = vmatprep.subr.bf16.mxu0 0
        %780 = vmatpush1.bf16.msra.mxu0 0
        %781 = vmatprep.subr.bf16.mxu0 0
        %782 = vmatpush1.bf16.msra.mxu0 0
        %783 = vmatprep.subr.bf16.mxu0 0
        %784 = vmatpush1.bf16.msra.mxu0 0
        %785 = vmatprep.subr.bf16.mxu0 0
        %786 = vmatpush1.bf16.msra.mxu0 0
        %787 = vmatprep.subr.bf16.mxu0 0
        %788 = vmatpush1.bf16.msra.mxu0 0
        %789 = vmatprep.subr.bf16.mxu0 0
        %790 = vmatpush1.bf16.msra.mxu0 0
        %791 = vmatprep.subr.bf16.mxu0 0
        %792 = vmatpush1.bf16.msra.mxu0 0
        %793 = vmatprep.mubr.bf16.mxu0 0
        %794 = vmatmul.mubr.bf16.gmra.mrb[0].mxu0 %v714
        %v795 = vpop.f32.mrb[0].mxu0
        %v796 = vadd.f32 0.0, %v795
        %v797 = vpop.f32.mrb[0].mxu0
        %v798 = vadd.f32 0.0, %v797
        %v799 = vpop.f32.mrb[0].mxu0
        %v800 = vadd.f32 0.0, %v799
        %v801 = vpop.f32.mrb[0].mxu0
        %v802 = vadd.f32 0.0, %v801
        %803 = vmatprep.mubr.bf16.mxu0 0
        %804 = vmatmul.mubr.bf16.gmra.mrb[0].mxu0 %v717
        %v805 = vpop.f32.mrb[0].mxu0
        %v806 = vadd.f32 0.0, %v805
        %v807 = vpop.f32.mrb[0].mxu0
        %v808 = vadd.f32 0.0, %v807
        %v809 = vpop.f32.mrb[0].mxu0
        %v810 = vadd.f32 0.0, %v809
        %v811 = vpop.f32.mrb[0].mxu0
        %v812 = vadd.f32 0.0, %v811
        %813 = vmatprep.mubr.bf16.mxu0 0
        %814 = vmatmul.mubr.bf16.gmra.mrb[0].mxu0 %v720
        %v815 = vpop.f32.mrb[0].mxu0
        %v816 = vadd.f32 0.0, %v815
        %v817 = vpop.f32.mrb[0].mxu0
        %v818 = vadd.f32 0.0, %v817
        %v819 = vpop.f32.mrb[0].mxu0
        %v820 = vadd.f32 0.0, %v819
        %v821 = vpop.f32.mrb[0].mxu0
        %v822 = vadd.f32 0.0, %v821
        %823 = vmatprep.mubr.bf16.mxu0 0
        %824 = vmatmul.mubr.bf16.gmra.mrb[0].mxu0 %v723
        %v825 = vpop.f32.mrb[0].mxu0
        %v826 = vadd.f32 0.0, %v825
        %v827 = vpop.f32.mrb[0].mxu0
        %v828 = vadd.f32 0.0, %v827
        %v829 = vpop.f32.mrb[0].mxu0
        %v830 = vadd.f32 0.0, %v829
        %v831 = vpop.f32.mrb[0].mxu0
        %v832 = vadd.f32 0.0, %v831
        %833 = vmatprep.mubr.bf16.mxu0 0
        %834 = vmatmul.mubr.bf16.gmra.mrb[0].mxu0 %v726
        %v835 = vpop.f32.mrb[0].mxu0
        %v836 = vadd.f32 0.0, %v835
        %v837 = vpop.f32.mrb[0].mxu0
        %v838 = vadd.f32 0.0, %v837
        %v839 = vpop.f32.mrb[0].mxu0
        %v840 = vadd.f32 0.0, %v839
        %v841 = vpop.f32.mrb[0].mxu0
        %v842 = vadd.f32 0.0, %v841
        %843 = vmatprep.mubr.bf16.mxu0 0
        %844 = vmatmul.mubr.bf16.gmra.mrb[0].mxu0 %v729
        %v845 = vpop.f32.mrb[0].mxu0
        %v846 = vadd.f32 0.0, %v845
        %v847 = vpop.f32.mrb[0].mxu0
        %v848 = vadd.f32 0.0, %v847
        %v849 = vpop.f32.mrb[0].mxu0
        %v850 = vadd.f32 0.0, %v849
        %v851 = vpop.f32.mrb[0].mxu0
        %v852 = vadd.f32 0.0, %v851
        %853 = vmatprep.mubr.bf16.mxu0 0
        %854 = vmatmul.mubr.bf16.gmra.mrb[0].mxu0 %v732
        %v855 = vpop.f32.mrb[0].mxu0
        %v856 = vadd.f32 0.0, %v855
        %v857 = vpop.f32.mrb[0].mxu0
        %v858 = vadd.f32 0.0, %v857
        %v859 = vpop.f32.mrb[0].mxu0
        %v860 = vadd.f32 0.0, %v859
        %v861 = vpop.f32.mrb[0].mxu0
        %v862 = vadd.f32 0.0, %v861
        %863 = vmatprep.mubr.bf16.mxu0 0
        %864 = vmatmul.mubr.bf16.gmra.mrb[0].mxu0 %v735
        %v865 = vpop.f32.mrb[0].mxu0
        %v866 = vadd.f32 0.0, %v865
        %v867 = vpop.f32.mrb[0].mxu0
        %v868 = vadd.f32 0.0, %v867
        %v869 = vpop.f32.mrb[0].mxu0
        %v870 = vadd.f32 0.0, %v869
        %v871 = vpop.f32.mrb[0].mxu0
        %v872 = vadd.f32 0.0, %v871
        %873 = vmatprep.mubr.bf16.mxu0 0
        %874 = vmatmul.mubr.bf16.gmra.mrb[0].mxu0 %v738
        %v875 = vpop.f32.mrb[0].mxu0
        %v876 = vadd.f32 0.0, %v875
        %v877 = vpop.f32.mrb[0].mxu0
        %v878 = vadd.f32 0.0, %v877
        %v879 = vpop.f32.mrb[0].mxu0
        %v880 = vadd.f32 0.0, %v879
        %v881 = vpop.f32.mrb[0].mxu0
        %v882 = vadd.f32 0.0, %v881
        %883 = vmatprep.mubr.bf16.mxu0 0
        %884 = vmatmul.mubr.bf16.gmra.mrb[0].mxu0 %v741
        %v885 = vpop.f32.mrb[0].mxu0
        %v886 = vadd.f32 0.0, %v885
        %v887 = vpop.f32.mrb[0].mxu0
        %v888 = vadd.f32 0.0, %v887
        %v889 = vpop.f32.mrb[0].mxu0
        %v890 = vadd.f32 0.0, %v889
        %v891 = vpop.f32.mrb[0].mxu0
        %v892 = vadd.f32 0.0, %v891
        %893 = vmatprep.mubr.bf16.mxu0 0
        %894 = vmatmul.mubr.bf16.gmra.mrb[0].mxu0 %v744
        %v895 = vpop.f32.mrb[0].mxu0
        %v896 = vadd.f32 0.0, %v895
        %v897 = vpop.f32.mrb[0].mxu0
        %v898 = vadd.f32 0.0, %v897
        %v899 = vpop.f32.mrb[0].mxu0
        %v900 = vadd.f32 0.0, %v899
        %v901 = vpop.f32.mrb[0].mxu0
        %v902 = vadd.f32 0.0, %v901
        %903 = vmatprep.mubr.bf16.mxu0 0
        %904 = vmatmul.mubr.bf16.gmra.mrb[0].mxu0 %v747
        %v905 = vpop.f32.mrb[0].mxu0
        %v906 = vadd.f32 0.0, %v905
        %v907 = vpop.f32.mrb[0].mxu0
        %v908 = vadd.f32 0.0, %v907
        %v909 = vpop.f32.mrb[0].mxu0
        %v910 = vadd.f32 0.0, %v909
        %v911 = vpop.f32.mrb[0].mxu0
        %v912 = vadd.f32 0.0, %v911
        %913 = vmatprep.mubr.bf16.mxu0 0
        %914 = vmatmul.mubr.bf16.gmra.mrb[0].mxu0 %v750
        %v915 = vpop.f32.mrb[0].mxu0
        %v916 = vadd.f32 0.0, %v915
        %v917 = vpop.f32.mrb[0].mxu0
        %v918 = vadd.f32 0.0, %v917
        %v919 = vpop.f32.mrb[0].mxu0
        %v920 = vadd.f32 0.0, %v919
        %v921 = vpop.f32.mrb[0].mxu0
        %v922 = vadd.f32 0.0, %v921
        %923 = vmatprep.mubr.bf16.mxu0 0
        %924 = vmatmul.mubr.bf16.gmra.mrb[0].mxu0 %v753
        %v925 = vpop.f32.mrb[0].mxu0
        %v926 = vadd.f32 0.0, %v925
        %v927 = vpop.f32.mrb[0].mxu0
        %v928 = vadd.f32 0.0, %v927
        %v929 = vpop.f32.mrb[0].mxu0
        %v930 = vadd.f32 0.0, %v929
        %v931 = vpop.f32.mrb[0].mxu0
        %v932 = vadd.f32 0.0, %v931
        %933 = vmatprep.mubr.bf16.mxu0 0
        %934 = vmatmul.mubr.bf16.gmra.mrb[0].mxu0 %v756
        %v935 = vpop.f32.mrb[0].mxu0
        %v936 = vadd.f32 0.0, %v935
        %v937 = vpop.f32.mrb[0].mxu0
        %v938 = vadd.f32 0.0, %v937
        %v939 = vpop.f32.mrb[0].mxu0
        %v940 = vadd.f32 0.0, %v939
        %v941 = vpop.f32.mrb[0].mxu0
        %v942 = vadd.f32 0.0, %v941
        %943 = vmatprep.mubr.bf16.mxu0 0
        %944 = vmatmul.mubr.bf16.gmra.mrb[0].mxu0 %v759
        %v945 = vpop.f32.mrb[0].mxu0
        %v946 = vadd.f32 0.0, %v945
        %v947 = vpop.f32.mrb[0].mxu0
        %v948 = vadd.f32 0.0, %v947
        %v949 = vpop.f32.mrb[0].mxu0
        %v950 = vadd.f32 0.0, %v949
        %v951 = vpop.f32.mrb[0].mxu0
        %v952 = vadd.f32 0.0, %v951
        %953 = vdwg.mxu0
        %v954 = vmax.f32 %v796, %v798
        %955 = vmax.xlane.f32.xlu0 %v954
        %v956 = vpop.xlane.xlu0 %955
        %v957 = vmax.f32 %v800, %v802
        %958 = vmax.xlane.f32.xlu0 %v957
        %v959 = vpop.xlane.xlu0 %958
        %v960 = vmax.f32 %v806, %v808
        %961 = vmax.xlane.f32.xlu0 %v960
        %v962 = vpop.xlane.xlu0 %961
        %v963 = vmax.f32 %v810, %v812
        %964 = vmax.xlane.f32.xlu0 %v963
        %v965 = vpop.xlane.xlu0 %964
        %v966 = vmax.f32 %v816, %v818
        %967 = vmax.xlane.f32.xlu0 %v966
        %v968 = vpop.xlane.xlu0 %967
        %v969 = vmax.f32 %v820, %v822
        %970 = vmax.xlane.f32.xlu0 %v969
        %v971 = vpop.xlane.xlu0 %970
        %v972 = vmax.f32 %v826, %v828
        %973 = vmax.xlane.f32.xlu0 %v972
        %v974 = vpop.xlane.xlu0 %973
        %v975 = vmax.f32 %v830, %v832
        %976 = vmax.xlane.f32.xlu0 %v975
        %v977 = vpop.xlane.xlu0 %976
        %v978 = vmax.f32 %v836, %v838
        %979 = vmax.xlane.f32.xlu0 %v978
        %v980 = vpop.xlane.xlu0 %979
        %v981 = vmax.f32 %v840, %v842
        %982 = vmax.xlane.f32.xlu0 %v981
        %v983 = vpop.xlane.xlu0 %982
        %v984 = vmax.f32 %v846, %v848
        %985 = vmax.xlane.f32.xlu0 %v984
        %v986 = vpop.xlane.xlu0 %985
        %v987 = vmax.f32 %v850, %v852
        %988 = vmax.xlane.f32.xlu0 %v987
        %v989 = vpop.xlane.xlu0 %988
        %v990 = vmax.f32 %v856, %v858
        %991 = vmax.xlane.f32.xlu0 %v990
        %v992 = vpop.xlane.xlu0 %991
        %v993 = vmax.f32 %v860, %v862
        %994 = vmax.xlane.f32.xlu0 %v993
        %v995 = vpop.xlane.xlu0 %994
        %v996 = vmax.f32 %v866, %v868
        %997 = vmax.xlane.f32.xlu0 %v996
        %v998 = vpop.xlane.xlu0 %997
        %v999 = vmax.f32 %v870, %v872
        %1000 = vmax.xlane.f32.xlu0 %v999
        %v1001 = vpop.xlane.xlu0 %1000
        %v1002 = vmax.f32 %v876, %v878
        %1003 = vmax.xlane.f32.xlu0 %v1002
        %v1004 = vpop.xlane.xlu0 %1003
        %v1005 = vmax.f32 %v880, %v882
        %1006 = vmax.xlane.f32.xlu0 %v1005
        %v1007 = vpop.xlane.xlu0 %1006
        %v1008 = vmax.f32 %v886, %v888
        %1009 = vmax.xlane.f32.xlu0 %v1008
        %v1010 = vpop.xlane.xlu0 %1009
        %v1011 = vmax.f32 %v890, %v892
        %1012 = vmax.xlane.f32.xlu0 %v1011
        %v1013 = vpop.xlane.xlu0 %1012
        %v1014 = vmax.f32 %v896, %v898
        %1015 = vmax.xlane.f32.xlu0 %v1014
        %v1016 = vpop.xlane.xlu0 %1015
        %v1017 = vmax.f32 %v900, %v902
        %1018 = vmax.xlane.f32.xlu0 %v1017
        %v1019 = vpop.xlane.xlu0 %1018
        %v1020 = vmax.f32 %v906, %v908
        %1021 = vmax.xlane.f32.xlu0 %v1020
        %v1022 = vpop.xlane.xlu0 %1021
        %v1023 = vmax.f32 %v910, %v912
        %1024 = vmax.xlane.f32.xlu0 %v1023
        %v1025 = vpop.xlane.xlu0 %1024
        %v1026 = vmax.f32 %v916, %v918
        %1027 = vmax.xlane.f32.xlu0 %v1026
        %v1028 = vpop.xlane.xlu0 %1027
        %v1029 = vmax.f32 %v920, %v922
        %1030 = vmax.xlane.f32.xlu0 %v1029
        %v1031 = vpop.xlane.xlu0 %1030
        %v1032 = vmax.f32 %v926, %v928
        %1033 = vmax.xlane.f32.xlu0 %v1032
        %v1034 = vpop.xlane.xlu0 %1033
        %v1035 = vmax.f32 %v930, %v932
        %1036 = vmax.xlane.f32.xlu0 %v1035
        %v1037 = vpop.xlane.xlu0 %1036
        %v1038 = vmax.f32 %v936, %v938
        %1039 = vmax.xlane.f32.xlu0 %v1038
        %v1040 = vpop.xlane.xlu0 %1039
        %v1041 = vmax.f32 %v940, %v942
        %1042 = vmax.xlane.f32.xlu0 %v1041
        %v1043 = vpop.xlane.xlu0 %1042
        %v1044 = vmax.f32 %v946, %v948
        %1045 = vmax.xlane.f32.xlu0 %v1044
        %v1046 = vpop.xlane.xlu0 %1045
        %v1047 = vmax.f32 %v950, %v952
        %1048 = vmax.xlane.f32.xlu0 %v1047
        %v1049 = vpop.xlane.xlu0 %1048
        %v1050 = vsub.f32 %v796, %v956
        %v1051 = vsub.f32 %v798, %v956
        %v1052 = vsub.f32 %v800, %v959
        %v1053 = vsub.f32 %v802, %v959
        %v1054 = vsub.f32 %v806, %v962
        %v1055 = vsub.f32 %v808, %v962
        %v1056 = vsub.f32 %v810, %v965
        %v1057 = vsub.f32 %v812, %v965
        %v1058 = vsub.f32 %v816, %v968
        %v1059 = vsub.f32 %v818, %v968
        %v1060 = vsub.f32 %v820, %v971
        %v1061 = vsub.f32 %v822, %v971
        %v1062 = vsub.f32 %v826, %v974
        %v1063 = vsub.f32 %v828, %v974
        %v1064 = vsub.f32 %v830, %v977
        %v1065 = vsub.f32 %v832, %v977
        %v1066 = vsub.f32 %v836, %v980
        %v1067 = vsub.f32 %v838, %v980
        %v1068 = vsub.f32 %v840, %v983
        %v1069 = vsub.f32 %v842, %v983
        %v1070 = vsub.f32 %v846, %v986
        %v1071 = vsub.f32 %v848, %v986
        %v1072 = vsub.f32 %v850, %v989
        %v1073 = vsub.f32 %v852, %v989
        %v1074 = vsub.f32 %v856, %v992
        %v1075 = vsub.f32 %v858, %v992
        %v1076 = vsub.f32 %v860, %v995
        %v1077 = vsub.f32 %v862, %v995
        %v1078 = vsub.f32 %v866, %v998
        %v1079 = vsub.f32 %v868, %v998
        %v1080 = vsub.f32 %v870, %v1001
        %v1081 = vsub.f32 %v872, %v1001
        %v1082 = vsub.f32 %v876, %v1004
        %v1083 = vsub.f32 %v878, %v1004
        %v1084 = vsub.f32 %v880, %v1007
        %v1085 = vsub.f32 %v882, %v1007
        %v1086 = vsub.f32 %v886, %v1010
        %v1087 = vsub.f32 %v888, %v1010
        %v1088 = vsub.f32 %v890, %v1013
        %v1089 = vsub.f32 %v892, %v1013
        %v1090 = vsub.f32 %v896, %v1016
        %v1091 = vsub.f32 %v898, %v1016
        %v1092 = vsub.f32 %v900, %v1019
        %v1093 = vsub.f32 %v902, %v1019
        %v1094 = vsub.f32 %v906, %v1022
        %v1095 = vsub.f32 %v908, %v1022
        %v1096 = vsub.f32 %v910, %v1025
        %v1097 = vsub.f32 %v912, %v1025
        %v1098 = vsub.f32 %v916, %v1028
        %v1099 = vsub.f32 %v918, %v1028
        %v1100 = vsub.f32 %v920, %v1031
        %v1101 = vsub.f32 %v922, %v1031
        %v1102 = vsub.f32 %v926, %v1034
        %v1103 = vsub.f32 %v928, %v1034
        %v1104 = vsub.f32 %v930, %v1037
        %v1105 = vsub.f32 %v932, %v1037
        %v1106 = vsub.f32 %v936, %v1040
        %v1107 = vsub.f32 %v938, %v1040
        %v1108 = vsub.f32 %v940, %v1043
        %v1109 = vsub.f32 %v942, %v1043
        %v1110 = vsub.f32 %v946, %v1046
        %v1111 = vsub.f32 %v948, %v1046
        %v1112 = vsub.f32 %v950, %v1049
        %v1113 = vsub.f32 %v952, %v1049
        %v1114 = vmul.f32 %v1050, 1.442695
        %v1115 = vpow.pop %v1114
        %v1116 = vmul.f32 %v1051, 1.442695
        %v1117 = vpow.pop %v1116
        %v1118 = vmul.f32 %v1052, 1.442695
        %v1119 = vpow.pop %v1118
        %v1120 = vmul.f32 %v1053, 1.442695
        %v1121 = vpow.pop %v1120
        %v1122 = vmul.f32 %v1054, 1.442695
        %v1123 = vpow.pop %v1122
        %v1124 = vmul.f32 %v1055, 1.442695
        %v1125 = vpow.pop %v1124
        %v1126 = vmul.f32 %v1056, 1.442695
        %v1127 = vpow.pop %v1126
        %v1128 = vmul.f32 %v1057, 1.442695
        %v1129 = vpow.pop %v1128
        %v1130 = vmul.f32 %v1058, 1.442695
        %v1131 = vpow.pop %v1130
        %v1132 = vmul.f32 %v1059, 1.442695
        %v1133 = vpow.pop %v1132
        %v1134 = vmul.f32 %v1060, 1.442695
        %v1135 = vpow.pop %v1134
        %v1136 = vmul.f32 %v1061, 1.442695
        %v1137 = vpow.pop %v1136
        %v1138 = vmul.f32 %v1062, 1.442695
        %v1139 = vpow.pop %v1138
        %v1140 = vmul.f32 %v1063, 1.442695
        %v1141 = vpow.pop %v1140
        %v1142 = vmul.f32 %v1064, 1.442695
        %v1143 = vpow.pop %v1142
        %v1144 = vmul.f32 %v1065, 1.442695
        %v1145 = vpow.pop %v1144
        %v1146 = vmul.f32 %v1066, 1.442695
        %v1147 = vpow.pop %v1146
        %v1148 = vmul.f32 %v1067, 1.442695
        %v1149 = vpow.pop %v1148
        %v1150 = vmul.f32 %v1068, 1.442695
        %v1151 = vpow.pop %v1150
        %v1152 = vmul.f32 %v1069, 1.442695
        %v1153 = vpow.pop %v1152
        %v1154 = vmul.f32 %v1070, 1.442695
        %v1155 = vpow.pop %v1154
        %v1156 = vmul.f32 %v1071, 1.442695
        %v1157 = vpow.pop %v1156
        %v1158 = vmul.f32 %v1072, 1.442695
        %v1159 = vpow.pop %v1158
        %v1160 = vmul.f32 %v1073, 1.442695
        %v1161 = vpow.pop %v1160
        %v1162 = vmul.f32 %v1074, 1.442695
        %v1163 = vpow.pop %v1162
        %v1164 = vmul.f32 %v1075, 1.442695
        %v1165 = vpow.pop %v1164
        %v1166 = vmul.f32 %v1076, 1.442695
        %v1167 = vpow.pop %v1166
        %v1168 = vmul.f32 %v1077, 1.442695
        %v1169 = vpow.pop %v1168
        %v1170 = vmul.f32 %v1078, 1.442695
        %v1171 = vpow.pop %v1170
        %v1172 = vmul.f32 %v1079, 1.442695
        %v1173 = vpow.pop %v1172
        %v1174 = vmul.f32 %v1080, 1.442695
        %v1175 = vpow.pop %v1174
        %v1176 = vmul.f32 %v1081, 1.442695
        %v1177 = vpow.pop %v1176
        %v1178 = vmul.f32 %v1082, 1.442695
        %v1179 = vpow.pop %v1178
        %v1180 = vmul.f32 %v1083, 1.442695
        %v1181 = vpow.pop %v1180
        %v1182 = vmul.f32 %v1084, 1.442695
        %v1183 = vpow.pop %v1182
        %v1184 = vmul.f32 %v1085, 1.442695
        %v1185 = vpow.pop %v1184
        %v1186 = vmul.f32 %v1086, 1.442695
        %v1187 = vpow.pop %v1186
        %v1188 = vmul.f32 %v1087, 1.442695
        %v1189 = vpow.pop %v1188
        %v1190 = vmul.f32 %v1088, 1.442695
        %v1191 = vpow.pop %v1190
        %v1192 = vmul.f32 %v1089, 1.442695
        %v1193 = vpow.pop %v1192
        %v1194 = vmul.f32 %v1090, 1.442695
        %v1195 = vpow.pop %v1194
        %v1196 = vmul.f32 %v1091, 1.442695
        %v1197 = vpow.pop %v1196
        %v1198 = vmul.f32 %v1092, 1.442695
        %v1199 = vpow.pop %v1198
        %v1200 = vmul.f32 %v1093, 1.442695
        %v1201 = vpow.pop %v1200
        %v1202 = vmul.f32 %v1094, 1.442695
        %v1203 = vpow.pop %v1202
        %v1204 = vmul.f32 %v1095, 1.442695
        %v1205 = vpow.pop %v1204
        %v1206 = vmul.f32 %v1096, 1.442695
        %v1207 = vpow.pop %v1206
        %v1208 = vmul.f32 %v1097, 1.442695
        %v1209 = vpow.pop %v1208
        %v1210 = vmul.f32 %v1098, 1.442695
        %v1211 = vpow.pop %v1210
        %v1212 = vmul.f32 %v1099, 1.442695
        %v1213 = vpow.pop %v1212
        %v1214 = vmul.f32 %v1100, 1.442695
        %v1215 = vpow.pop %v1214
        %v1216 = vmul.f32 %v1101, 1.442695
        %v1217 = vpow.pop %v1216
        %v1218 = vmul.f32 %v1102, 1.442695
        %v1219 = vpow.pop %v1218
        %v1220 = vmul.f32 %v1103, 1.442695
        %v1221 = vpow.pop %v1220
        %v1222 = vmul.f32 %v1104, 1.442695
        %v1223 = vpow.pop %v1222
        %v1224 = vmul.f32 %v1105, 1.442695
        %v1225 = vpow.pop %v1224
        %v1226 = vmul.f32 %v1106, 1.442695
        %v1227 = vpow.pop %v1226
        %v1228 = vmul.f32 %v1107, 1.442695
        %v1229 = vpow.pop %v1228
        %v1230 = vmul.f32 %v1108, 1.442695
        %v1231 = vpow.pop %v1230
        %v1232 = vmul.f32 %v1109, 1.442695
        %v1233 = vpow.pop %v1232
        %v1234 = vmul.f32 %v1110, 1.442695
        %v1235 = vpow.pop %v1234
        %v1236 = vmul.f32 %v1111, 1.442695
        %v1237 = vpow.pop %v1236
        %v1238 = vmul.f32 %v1112, 1.442695
        %v1239 = vpow.pop %v1238
        %v1240 = vmul.f32 %v1113, 1.442695
        %v1241 = vpow.pop %v1240
        %v1242 = vpack.c.bf16 %v1119, %v1115
        %v1243 = vpack.c.bf16 %v1121, %v1117
        %v1244 = vpack.c.bf16 %v1127, %v1123
        %v1245 = vpack.c.bf16 %v1129, %v1125
        %v1246 = vpack.c.bf16 %v1135, %v1131
        %v1247 = vpack.c.bf16 %v1137, %v1133
        %v1248 = vpack.c.bf16 %v1143, %v1139
        %v1249 = vpack.c.bf16 %v1145, %v1141
        %v1250 = vpack.c.bf16 %v1151, %v1147
        %v1251 = vpack.c.bf16 %v1153, %v1149
        %v1252 = vpack.c.bf16 %v1159, %v1155
        %v1253 = vpack.c.bf16 %v1161, %v1157
        %v1254 = vpack.c.bf16 %v1167, %v1163
        %v1255 = vpack.c.bf16 %v1169, %v1165
        %v1256 = vpack.c.bf16 %v1175, %v1171
        %v1257 = vpack.c.bf16 %v1177, %v1173
        %v1258 = vpack.c.bf16 %v1183, %v1179
        %v1259 = vpack.c.bf16 %v1185, %v1181
        %v1260 = vpack.c.bf16 %v1191, %v1187
        %v1261 = vpack.c.bf16 %v1193, %v1189
        %v1262 = vpack.c.bf16 %v1199, %v1195
        %v1263 = vpack.c.bf16 %v1201, %v1197
        %v1264 = vpack.c.bf16 %v1207, %v1203
        %v1265 = vpack.c.bf16 %v1209, %v1205
        %v1266 = vpack.c.bf16 %v1215, %v1211
        %v1267 = vpack.c.bf16 %v1217, %v1213
        %v1268 = vpack.c.bf16 %v1223, %v1219
        %v1269 = vpack.c.bf16 %v1225, %v1221
        %v1270 = vpack.c.bf16 %v1231, %v1227
        %v1271 = vpack.c.bf16 %v1233, %v1229
        %v1272 = vpack.c.bf16 %v1239, %v1235
        %v1273 = vpack.c.bf16 %v1241, %v1237
        %1274 = vmatprep.subr.bf16.mxu0 %v1243
        %1275 = vmatpush1.bf16.xpose.msra.mxu0 %v1242
        %1276 = vmatprep.subr.bf16.mxu0 %v1245
        %1277 = vmatpush1.bf16.xpose.msra.mxu0 %v1244
        %1278 = vmatprep.subr.bf16.mxu0 %v1247
        %1279 = vmatpush1.bf16.xpose.msra.mxu0 %v1246
        %1280 = vmatprep.subr.bf16.mxu0 %v1249
        %1281 = vmatpush1.bf16.xpose.msra.mxu0 %v1248
        %1282 = vmatprep.subr.bf16.mxu0 %v1251
        %1283 = vmatpush1.bf16.xpose.msra.mxu0 %v1250
        %1284 = vmatprep.subr.bf16.mxu0 %v1253
        %1285 = vmatpush1.bf16.xpose.msra.mxu0 %v1252
        %1286 = vmatprep.subr.bf16.mxu0 %v1255
        %1287 = vmatpush1.bf16.xpose.msra.mxu0 %v1254
        %1288 = vmatprep.subr.bf16.mxu0 %v1257
        %1289 = vmatpush1.bf16.xpose.msra.mxu0 %v1256
        %1290 = vmatprep.subr.bf16.mxu0 %v1259
        %1291 = vmatpush1.bf16.xpose.msra.mxu0 %v1258
        %1292 = vmatprep.subr.bf16.mxu0 %v1261
        %1293 = vmatpush1.bf16.xpose.msra.mxu0 %v1260
        %1294 = vmatprep.subr.bf16.mxu0 %v1263
        %1295 = vmatpush1.bf16.xpose.msra.mxu0 %v1262
        %1296 = vmatprep.subr.bf16.mxu0 %v1265
        %1297 = vmatpush1.bf16.xpose.msra.mxu0 %v1264
        %1298 = vmatprep.subr.bf16.mxu0 %v1267
        %1299 = vmatpush1.bf16.xpose.msra.mxu0 %v1266
        %1300 = vmatprep.subr.bf16.mxu0 %v1269
        %1301 = vmatpush1.bf16.xpose.msra.mxu0 %v1268
        %1302 = vmatprep.subr.bf16.mxu0 %v1271
        %1303 = vmatpush1.bf16.xpose.msra.mxu0 %v1270
        %1304 = vmatprep.subr.bf16.mxu0 %v1273
        %1305 = vmatpush1.bf16.xpose.msra.mxu0 %v1272
        %1306 = vmatprep.mubr.bf16.mxu0 %v284
        %1307 = vmatmul.mubr.bf16.gmra.mrb[0].mxu0 %v283
        %v1308 = vpop.f32.mrb[0].mxu0
        %v1309 = vadd.f32 0.0, %v1308
        %v1310 = vpop.f32.mrb[0].mxu0
        %v1311 = vadd.f32 0.0, %v1310
        %v1312 = vpop.f32.mrb[0].mxu0
        %v1313 = vadd.f32 0.0, %v1312
        %v1314 = vpop.f32.mrb[0].mxu0
        %v1315 = vadd.f32 0.0, %v1314
        %1316 = vmatprep.mubr.bf16.mxu0 %v286
        %1317 = vmatmul.mubr.bf16.gmra.mrb[0].mxu0 %v285
        %v1318 = vpop.f32.mrb[0].mxu0
        %v1319 = vadd.f32 0.0, %v1318
        %v1320 = vpop.f32.mrb[0].mxu0
        %v1321 = vadd.f32 0.0, %v1320
        %v1322 = vpop.f32.mrb[0].mxu0
        %v1323 = vadd.f32 0.0, %v1322
        %v1324 = vpop.f32.mrb[0].mxu0
        %v1325 = vadd.f32 0.0, %v1324
        %1326 = vdwg.mxu0
        %1327 = vmatprep.subr.bf16.mxu0 %v1243
        %1328 = vmatpush1.bf16.xpose.msra.mxu0 %v1242
        %1329 = vmatprep.subr.bf16.mxu0 %v1245
        %1330 = vmatpush1.bf16.xpose.msra.mxu0 %v1244
        %1331 = vmatprep.subr.bf16.mxu0 %v1247
        %1332 = vmatpush1.bf16.xpose.msra.mxu0 %v1246
        %1333 = vmatprep.subr.bf16.mxu0 %v1249
        %1334 = vmatpush1.bf16.xpose.msra.mxu0 %v1248
        %1335 = vmatprep.subr.bf16.mxu0 %v1251
        %1336 = vmatpush1.bf16.xpose.msra.mxu0 %v1250
        %1337 = vmatprep.subr.bf16.mxu0 %v1253
        %1338 = vmatpush1.bf16.xpose.msra.mxu0 %v1252
        %1339 = vmatprep.subr.bf16.mxu0 %v1255
        %1340 = vmatpush1.bf16.xpose.msra.mxu0 %v1254
        %1341 = vmatprep.subr.bf16.mxu0 %v1257
        %1342 = vmatpush1.bf16.xpose.msra.mxu0 %v1256
        %1343 = vmatprep.subr.bf16.mxu0 %v1259
        %1344 = vmatpush1.bf16.xpose.msra.mxu0 %v1258
        %1345 = vmatprep.subr.bf16.mxu0 %v1261
        %1346 = vmatpush1.bf16.xpose.msra.mxu0 %v1260
        %1347 = vmatprep.subr.bf16.mxu0 %v1263
        %1348 = vmatpush1.bf16.xpose.msra.mxu0 %v1262
        %1349 = vmatprep.subr.bf16.mxu0 %v1265
        %1350 = vmatpush1.bf16.xpose.msra.mxu0 %v1264
        %1351 = vmatprep.subr.bf16.mxu0 %v1267
        %1352 = vmatpush1.bf16.xpose.msra.mxu0 %v1266
        %1353 = vmatprep.subr.bf16.mxu0 %v1269
        %1354 = vmatpush1.bf16.xpose.msra.mxu0 %v1268
        %1355 = vmatprep.subr.bf16.mxu0 %v1271
        %1356 = vmatpush1.bf16.xpose.msra.mxu0 %v1270
        %1357 = vmatprep.subr.bf16.mxu0 %v1273
        %1358 = vmatpush1.bf16.xpose.msra.mxu0 %v1272
        %1359 = vmatprep.mubr.bf16.mxu0 1065369472
        %1360 = vmatmul.mubr.bf16.gmra.mrb[0].mxu0 1065369472
        %v1361 = vpop.f32.mrb[0].mxu0
        %v1362 = vadd.f32 0.0, %v1361
        %v1363 = vpop.f32.mrb[0].mxu0
        %v1364 = vadd.f32 0.0, %v1363
        %v1365 = vpop.f32.mrb[0].mxu0
        %v1366 = vpop.f32.mrb[0].mxu0
        %1367 = vdwg.mxu0
        %v1368 = vld [vmem:[#allocation5] sm:$0xff]
        %v1369 = vld [vmem:[#allocation5 + $0x8] sm:$0xff]
        %v1370 = vld [vmem:[#allocation5 + $0x10] sm:$0xff]
        %v1371 = vld [vmem:[#allocation5 + $0x18] sm:$0xff]
        %v1373 = vsel %vm375, %v1368, 0
        %v1376 = vsel %vm375, %v1369, 0
        %v1379 = vsel %vm375, %v1370, 0
        %v1382 = vsel %vm375, %v1371, 0
        %1384 = vmatprep.subr.mxu0 %v1311
        %1385 = vmatpush1.msra.mxu0 %v1309
        %1386 = vmatprep.subr.mxu0 %v1315
        %1387 = vmatpush1.msra.mxu0 %v1313
        %1388 = vmatprep.subr.mxu0 %v1321
        %1389 = vmatpush1.msra.mxu0 %v1319
        %1390 = vmatprep.subr.mxu0 %v1325
        %1391 = vmatpush1.msra.mxu0 %v1323
        %1392 = vmatprep.subr.mxu0 0.0
        %1393 = vmatpush1.msra.mxu0 0.0
        %1394 = vmatprep.subr.mxu0 0.0
        %1395 = vmatpush1.msra.mxu0 0.0
        %1396 = vmatprep.subr.mxu0 0.0
        %1397 = vmatpush1.msra.mxu0 0.0
        %1398 = vmatprep.subr.mxu0 0.0
        %1399 = vmatpush1.msra.mxu0 0.0
        %1400 = vmatprep.subr.mxu0 0.0
        %1401 = vmatpush1.msra.mxu0 0.0
        %1402 = vmatprep.subr.mxu0 0.0
        %1403 = vmatpush1.msra.mxu0 0.0
        %1404 = vmatprep.subr.mxu0 0.0
        %1405 = vmatpush1.msra.mxu0 0.0
        %1406 = vmatprep.subr.mxu0 0.0
        %1407 = vmatpush1.msra.mxu0 0.0
        %1408 = vmatprep.subr.mxu0 0.0
        %1409 = vmatpush1.msra.mxu0 0.0
        %1410 = vmatprep.subr.mxu0 0.0
        %1411 = vmatpush1.msra.mxu0 0.0
        %1412 = vmatprep.subr.mxu0 0.0
        %1413 = vmatpush1.msra.mxu0 0.0
        %1414 = vmatprep.subr.mxu0 0.0
        %1415 = vmatpush1.msra.mxu0 0.0
        %1416 = vmatprep.subr.mxu0 0.0
        %1417 = vmatpush1.msra.mxu0 0.0
        %1418 = vmatprep.subr.mxu0 0.0
        %1419 = vmatpush1.msra.mxu0 0.0
        %1420 = vmatprep.subr.mxu0 0.0
        %1421 = vmatpush1.msra.mxu0 0.0
        %1422 = vmatprep.subr.mxu0 0.0
        %1423 = vmatpush1.msra.mxu0 0.0
        %1424 = vmatprep.subr.mxu0 0.0
        %1425 = vmatpush1.msra.mxu0 0.0
        %1426 = vmatprep.subr.mxu0 0.0
        %1427 = vmatpush1.msra.mxu0 0.0
        %1428 = vmatprep.subr.mxu0 0.0
        %1429 = vmatpush1.msra.mxu0 0.0
        %1430 = vmatprep.subr.mxu0 0.0
        %1431 = vmatpush1.msra.mxu0 0.0
        %1432 = vmatprep.subr.mxu0 0.0
        %1433 = vmatpush1.msra.mxu0 0.0
        %1434 = vmatprep.subr.mxu0 0.0
        %1435 = vmatpush1.msra.mxu0 0.0
        %1436 = vmatprep.subr.mxu0 0.0
        %1437 = vmatpush1.msra.mxu0 0.0
        %1438 = vmatprep.subr.mxu0 0.0
        %1439 = vmatpush1.msra.mxu0 0.0
        %1440 = vmatprep.subr.mxu0 0.0
        %1441 = vmatpush1.msra.mxu0 0.0
        %1442 = vmatprep.subr.mxu0 0.0
        %1443 = vmatpush1.msra.mxu0 0.0
        %1444 = vmatprep.subr.mxu0 0.0
        %1445 = vmatpush1.msra.mxu0 0.0
        %1446 = vmatprep.subr.mxu0 0.0
        %1447 = vmatpush1.msra.mxu0 0.0
        %1448 = vmatprep.mubr.f32.mxu0 0.0
        %1449 = vmatmul.mubr.f32.gmra.mrb[0].mxu0 %v1373
        %v1450 = vpop.f32.mrb[0].mxu0
        %v1451 = vadd.f32 0.0, %v1450
        %v1452 = vpop.f32.mrb[0].mxu0
        %v1453 = vadd.f32 0.0, %v1452
        %1454 = vmatprep.mubr.f32.mxu0 0.0
        %1455 = vmatmul.mubr.f32.gmra.mrb[0].mxu0 %v1376
        %v1456 = vpop.f32.mrb[0].mxu0
        %v1457 = vadd.f32 0.0, %v1456
        %v1458 = vpop.f32.mrb[0].mxu0
        %v1459 = vadd.f32 0.0, %v1458
        %1460 = vmatprep.mubr.f32.mxu0 0.0
        %1461 = vmatmul.mubr.f32.gmra.mrb[0].mxu0 %v1379
        %v1462 = vpop.f32.mrb[0].mxu0
        %v1463 = vadd.f32 0.0, %v1462
        %v1464 = vpop.f32.mrb[0].mxu0
        %v1465 = vadd.f32 0.0, %v1464
        %1466 = vmatprep.mubr.f32.mxu0 0.0
        %1467 = vmatmul.mubr.f32.gmra.mrb[0].mxu0 %v1382
        %v1468 = vpop.f32.mrb[0].mxu0
        %v1469 = vadd.f32 0.0, %v1468
        %v1470 = vpop.f32.mrb[0].mxu0
        %v1471 = vadd.f32 0.0, %v1470
        %1472 = vdwg.mxu0
        %v1473 = vrcp.pop %v1362
        %v1474 = vrcp.pop %v1364
        %v1475 = vlaneseq
        %v1476 = vshrl.u32 %v1475, 7
        %v1477 = vsub.s32 0, %v1476
        %v1478 = vrot.slane %v1473, %v1477
        %v1479 = vlaneseq
        %v1480 = vshrl.u32 %v1479, 7
        %v1481 = vsub.s32 0, %v1480
        %v1482 = vrot.slane %v1474, %v1481
        %v1483 = vmul.f32 %v1451, %v1478
        %v1484 = vmul.f32 %v1453, %v1482
        %v1485 = vmul.f32 %v1457, %v1478
        %v1486 = vmul.f32 %v1459, %v1482
        %v1487 = vmul.f32 %v1463, %v1478
        %v1488 = vmul.f32 %v1465, %v1482
        %v1489 = vmul.f32 %v1469, %v1478
        %v1490 = vmul.f32 %v1471, %v1482
        %v1491 = vld [vmem:[%s4] sm:$0xff]
        %v1492 = vld [vmem:[%s4 + $0x8] sm:$0xff]
        %v1493 = vld [vmem:[%s4 + $0x10] sm:$0xff]
        %v1494 = vld [vmem:[%s4 + $0x18] sm:$0xff]
        %1496 = vset.pattern.permute.xlu0 0
        %1497 = vperm.xlu0 %1496, %v1491
        %v1498 = vpop.permute.xlu0 %1497
        %1501 = vset.pattern.permute.xlu0 0
        %1502 = vperm.xlu0 %1501, %v1492
        %v1503 = vpop.permute.xlu0 %1502
        %1506 = vset.pattern.permute.xlu0 0
        %1507 = vperm.xlu0 %1506, %v1493
        %v1508 = vpop.permute.xlu0 %1507
        %1511 = vset.pattern.permute.xlu0 0
        %1512 = vperm.xlu0 %1511, %v1494
        %v1513 = vpop.permute.xlu0 %1512
        %v1515 = vadd.f32 %v1483, %v1498
        %v1516 = vadd.f32 %v1484, %v1498
        %v1517 = vadd.f32 %v1485, %v1503
        %v1518 = vadd.f32 %v1486, %v1503
        %v1519 = vadd.f32 %v1487, %v1508
        %v1520 = vadd.f32 %v1488, %v1508
        %v1521 = vadd.f32 %v1489, %v1513
        %v1522 = vadd.f32 %v1490, %v1513
        %v1523 = vadd.f32 %v1515, %v292
        %v1524 = vadd.f32 %v1516, %v293
        %v1525 = vadd.f32 %v1517, %v294
        %v1526 = vadd.f32 %v1518, %v295
        %v1527 = vadd.f32 %v1519, %v296
        %v1528 = vadd.f32 %v1520, %v297
        %v1529 = vadd.f32 %v1521, %v298
        %v1530 = vadd.f32 %v1522, %v299
        %1531 = vst [vmem:[%s271] sm:$0xff] %v1523
        %1532 = vst [vmem:[%s271 + $0x8] sm:$0xff] %v1524
        %1533 = vst [vmem:[%s271 + $0x10] sm:$0xff] %v1525
        %1534 = vst [vmem:[%s271 + $0x18] sm:$0xff] %v1526
        %1535 = vst [vmem:[%s271 + $0x20] sm:$0xff] %v1527
        %1536 = vst [vmem:[%s271 + $0x28] sm:$0xff] %v1528
        %1537 = vst [vmem:[%s271 + $0x30] sm:$0xff] %v1529
        %1538 = vst [vmem:[%s271 + $0x38] sm:$0xff] %v1530
        %s1539 = sand.u32 %s155, 1
        %s1540 = scalar_lea.sflag [#allocation4], %s1539
        %s1541 = sand.u32 %s155, 1
        %s1542 = smul.addr %s1541, 64
        %s1543 = scalar_lea.vmem [#allocation7], %s1542
        // Predicated region
        $region49: #{tpu_custom_call.1} parent=39 // pred_check
          %p1544 = pneg %p165
        $region50: #{tpu_custom_call.1} parent=39 // pred_check_branch
          %1546 = sbr.rel (%p1544) target = $region52
        $region51: #{tpu_custom_call.1} parent=39 // pred_region
          %s1547 = smul.u32 2, %s28
          %s1549 = ssub.s32 1024, 1024
          %1550 = vsyncadd %s1540, %s1549
          %s1551 = smul.addr %s27, 8
          %s1552 = sadd.s32 %s1547, %s1551
          %s1553 = smul.addr %s1552, 128
          %s1554 = scalar_lea.hbm %s5, %s1553
          %s1555 = sshll.u32 %s1543, 4
          %s1556 = int_to_ptr.vmem [resolvable:$true] %s1555
          %1561 = dma.vmem_to_hbm [thread:$0]  %s1556, 1024, %s1554, %s1540, 256, 256, 16
        $region52: #{tpu_custom_call.1} parent=39 // pred_fallthru
          _
      $region40: #{tpu_custom_call.1} parent=5 // pred_fallthru
        _
      %p1562 = scmp.le.s32.totalorder 2, %s18
      // Predicated region
      $region53: #{tpu_custom_call.1} parent=5 // pred_check
        %p1563 = pneg %p1562
      $region54: #{tpu_custom_call.1} parent=5 // pred_check_branch
        %1565 = sbr.rel (%p1563) target = $region56
      $region55: #{tpu_custom_call.1} parent=5 // pred_region
        %s1566 = ssub.s32 %s18, 2
        // Predicated region
        $region57: #{tpu_custom_call.1} parent=55 // pred_check
          %p1567 = pneg %p171
        $region58: #{tpu_custom_call.1} parent=55 // pred_check_branch
          %1569 = sbr.rel (%p1567) target = $region60
        $region59: #{tpu_custom_call.1} parent=55 // pred_region
          %s1570 = sand.u32 %s156, 1
          %s1571 = scalar_lea.sflag [#allocation4], %s1570
          %s1572 = sand.u32 %s156, 1
          %s1573 = smul.addr %s1572, 64
          %s1574 = scalar_lea.vmem [#allocation7], %s1573
          %1575 = dma.done %s1571, 1024
        $region60: #{tpu_custom_call.1} parent=55 // pred_fallthru
          _
      $region56: #{tpu_custom_call.1} parent=5 // pred_fallthru
        _
    $region6: #{tpu_custom_call.1} parent=1 // loop_footer
      %s22 = sadd.s32 1, %s18
    $region7: #{tpu_custom_call.1} parent=1 // loop_footer_branch
      %17 = sbr.rel target = $region3
    $region8: #{tpu_custom_call.1} parent=1 // loop_exit
      _
    %1576 = vsyncpa [#allocation3], 1
    %s1577 = scalar_lea.sflag [#allocation3], 1
    %1578 = vsyncpa %s1577, 1
    %1579 = vsyncpa [#allocation6], 1
    %1580 = vsyncpa [#allocation4], 1
    %s1581 = scalar_lea.sflag [#allocation4], 1
    %1582 = vsyncpa %s1581, 1

</llo_original>
